<compile_context>
chip_gen: v6e
topology: v6e:2x2x1
jax: 0.10.0
libtpu: 0.0.40
codegen_flags: <defaults>
</compile_context>

<pallas_src>
import functools

import jax
import jax.numpy as jnp
from jax.experimental import pallas as pl
from jax.experimental.pallas import tpu as pltpu

_SUBLANE = 8  # f32 sublane count


def _round_up(x, m):
    return ((x + m - 1) // m) * m


def _choose_batch_tile(B, max_tile=512, min_parallel_rows=128):
    """Balanced batch tile: even step count >=2 once B is modest (keeps both
    v7x TensorCores fed), tiles capped at ~512 rows (>= ~85% of HBM roofline,
    no vreg-spill risk), and at most 7 rows of tail padding."""
    if B < min_parallel_rows:
        return max(_SUBLANE, _round_up(B, _SUBLANE))
    n_steps = max(2, pl.cdiv(B, max_tile))
    if n_steps % 2:
        n_steps += 1  # even step count so neither v7x TC idles a step
    return max(_SUBLANE, _round_up(pl.cdiv(B, n_steps), _SUBLANE))


def mlp_kernel(x_ref, w1_ref, b1_ref, w2_ref, b2_ref, w3_ref, b3_ref, o_ref,
               *, precision):
    # One batch tile per grid step; weights/biases fully resident in VMEM.
    # Cast x in-kernel (HBM stream stays f32-narrow; cast hides under DMA).
    x = x_ref[...].astype(w1_ref.dtype)                                  # (TB, D_in)

    # Layer 1 — MXU matmul, f32 accumulation; bias+ReLU in f32 on the VPU.
    h1 = jnp.dot(x, w1_ref[...], preferred_element_type=jnp.float32,
                 precision=precision)                                    # (TB, 128)
    h1 = jnp.maximum(h1 + b1_ref[...], 0.0).astype(w2_ref.dtype)

    # Layer 2.
    h2 = jnp.dot(h1, w2_ref[...], preferred_element_type=jnp.float32,
                 precision=precision)                                    # (TB, 64)
    h2 = jnp.maximum(h2 + b2_ref[...], 0.0).astype(w3_ref.dtype)

    # Layer 3 (no activation) — narrow (TB, C) store, masked but few bytes.
    out = jnp.dot(h2, w3_ref[...], preferred_element_type=jnp.float32,
                  precision=precision)                                   # (TB, C)
    o_ref[...] = (out + b3_ref[...]).astype(o_ref.dtype)


def prepare_params(params, *, use_bf16=True):
    """One-time weight prep (call OUTSIDE the serving loop): optional bf16 cast
    of the matmul operands; biases stay f32 (f32 VPU path on every chip)."""
    wdt = jnp.bfloat16 if use_bf16 else jnp.float32
    return {
        "w1": params["w1"].astype(wdt),
        "w2": params["w2"].astype(wdt),
        "w3": params["w3"].astype(wdt),
        "b1": params["b1"].reshape(1, -1).astype(jnp.float32),
        "b2": params["b2"].reshape(1, -1).astype(jnp.float32),
        "b3": params["b3"].reshape(1, -1).astype(jnp.float32),
    }


def diagnosis_model_forward(x, prepared, *, batch_tile=None):
    """x: (B, input_size) float32 (streamed unpadded).
    prepared: output of prepare_params()."""
    B, D_in = x.shape
    assert prepared["w1"].shape[0] == D_in
    C = prepared["w3"].shape[1]

    use_f32 = prepared["w1"].dtype == jnp.float32
    precision = jax.lax.Precision.HIGHEST if use_f32 else None

    tb = batch_tile if batch_tile is not None else _choose_batch_tile(B)
    tb = max(_SUBLANE, _round_up(min(tb, max(B, _SUBLANE)), _SUBLANE))
    grid = (pl.cdiv(B, tb),)  # partial tail block handled by masked writeback

    # Weights/biases: full-array, pinned resident in VMEM (no per-step DMA).
    resident = pl.BlockSpec(memory_space=pltpu.MemorySpace.VMEM)

    return pl.pallas_call(
        functools.partial(mlp_kernel, precision=precision),
        out_shape=jax.ShapeDtypeStruct((B, C), jnp.float32),
        grid_spec=pltpu.PrefetchScalarGridSpec(
            num_scalar_prefetch=0,
            grid=grid,
            in_specs=[
                pl.BlockSpec((tb, D_in), lambda i: (i, 0)),  # x tile (pipelined)
                resident,  # w1
                resident,  # b1
                resident,  # w2
                resident,  # b2
                resident,  # w3
                resident,  # b3
            ],
            out_specs=pl.BlockSpec((tb, C), lambda i: (i, 0)),  # narrow (tb, C) store
        ),
        compiler_params=pltpu.CompilerParams(
            dimension_semantics=("parallel",),
            vmem_limit_bytes=32 * 1024 * 1024,  # footprint is tiny; explicit headroom
        ),
    )(x, prepared["w1"], prepared["b1"], prepared["w2"], prepared["b2"],
      prepared["w3"], prepared["b3"])


def init_params(key, input_size, num_classes):
    """Deterministic init mimicking nn.Linear's U(-1/sqrt(fan_in), 1/sqrt(fan_in))."""
    def linear(k, fan_in, fan_out):
        kw, kb = jax.random.split(k)
        bound = 1.0 / jnp.sqrt(jnp.float32(fan_in))
        w = jax.random.uniform(kw, (fan_in, fan_out), jnp.float32, -bound, bound)
        b = jax.random.uniform(kb, (1, fan_out), jnp.float32, -bound, bound)
        return w, b

    k1, k2, k3 = jax.random.split(key, 3)
    w1, b1 = linear(k1, input_size, 128)
    w2, b2 = linear(k2, 128, 64)
    w3, b3 = linear(k3, 64, num_classes)
    return {"w1": w1, "b1": b1, "w2": w2, "b2": b2, "w3": w3, "b3": b3}


def reference_forward(x, p):
    h1 = jnp.maximum(x @ p["w1"] + p["b1"], 0.0)
    h2 = jnp.maximum(h1 @ p["w2"] + p["b2"], 0.0)
    return h2 @ p["w3"] + p["b3"]


if __name__ == "__main__":
    INPUT_SIZE = 32    # len(all_symptoms) — synthetic
    NUM_CLASSES = 16   # len(le.classes_) — synthetic
    BATCH = 8

    key = jax.random.PRNGKey(0)
    kx, kp, kxl = jax.random.split(key, 3)
    x = jax.random.uniform(kx, (BATCH, INPUT_SIZE), jnp.float32)
    params = init_params(kp, INPUT_SIZE, NUM_CLASSES)
    ref = reference_forward(x, params)

    # One-time weight prep (hoisted out of the per-call path).
    p_f32 = prepare_params(params, use_bf16=False)
    p_bf16 = prepare_params(params, use_bf16=True)

    # 1) f32 path (precision=HIGHEST dots): tight match vs f32 reference.
    out_f32 = jax.block_until_ready(diagnosis_model_forward(x, p_f32))
    assert out_f32.shape == (BATCH, NUM_CLASSES)
    assert jnp.allclose(out_f32, ref, atol=1e-5, rtol=1e-5), "f32 mismatch vs reference"

    # 2) bf16-operand fast path (f32 accumulation), loosened tolerance.
    out_bf16 = jax.block_until_ready(diagnosis_model_forward(x, p_bf16))
    assert out_bf16.shape == (BATCH, NUM_CLASSES)
    assert jnp.allclose(out_bf16, ref, atol=5e-2, rtol=5e-2), "bf16 mismatch vs reference"

    # 3) Larger, non-tile-aligned batch: exercises the balanced multi-step grid
    #    (even step count for v7x) and the masked partial tail block.
    x_large = jax.random.uniform(kxl, (600, INPUT_SIZE), jnp.float32)
    out_large = jax.block_until_ready(diagnosis_model_forward(x_large, p_bf16))
    ref_large = reference_forward(x_large, params)
    assert out_large.shape == (600, NUM_CLASSES)
    assert jnp.allclose(out_large, ref_large, atol=5e-2, rtol=5e-2), "large-batch mismatch"

    print("KERNEL_OK")
</pallas_src>

<mosaic_0001>
module attributes {stable_mosaic.version = 11 : i64} {
  func.func @mlp_kernel(%arg0: i32, %arg1: memref<8x32xf32, #tpu.memory_space<vmem>>, %arg2: memref<32x128xf32, #tpu.memory_space<vmem>>, %arg3: memref<1x128xf32, #tpu.memory_space<vmem>>, %arg4: memref<128x64xf32, #tpu.memory_space<vmem>>, %arg5: memref<1x64xf32, #tpu.memory_space<vmem>>, %arg6: memref<64x16xf32, #tpu.memory_space<vmem>>, %arg7: memref<1x16xf32, #tpu.memory_space<vmem>>, %arg8: memref<8x16xf32, #tpu.memory_space<vmem>>) attributes {dimension_semantics = [#tpu.dimension_semantics<parallel>], iteration_bounds = array<i64: 1>, scalar_prefetch = 0 : i64, scratch_operands = 0 : i64, tpu.core_type = #tpu.core_type<tc>, window_params = [{transform_indices = @transform_0, window_bounds = array<i64: 8, 32>}, {pipeline_mode = #tpu.pipeline_mode<synchronous>, transform_indices = @transform_1, window_bounds = array<i64: 32, 128>}, {pipeline_mode = #tpu.pipeline_mode<synchronous>, transform_indices = @transform_2, window_bounds = array<i64: 1, 128>}, {pipeline_mode = #tpu.pipeline_mode<synchronous>, transform_indices = @transform_3, window_bounds = array<i64: 128, 64>}, {pipeline_mode = #tpu.pipeline_mode<synchronous>, transform_indices = @transform_4, window_bounds = array<i64: 1, 64>}, {pipeline_mode = #tpu.pipeline_mode<synchronous>, transform_indices = @transform_5, window_bounds = array<i64: 64, 16>}, {pipeline_mode = #tpu.pipeline_mode<synchronous>, transform_indices = @transform_6, window_bounds = array<i64: 1, 16>}, {transform_indices = @transform_7, window_bounds = array<i64: 8, 16>}]} {
    %c0 = arith.constant 0 : index
    %c0_0 = arith.constant 0 : index
    %0 = vector.load %arg1[%c0, %c0_0] : memref<8x32xf32, #tpu.memory_space<vmem>>, vector<8x32xf32>
    %c0_1 = arith.constant 0 : index
    %c0_2 = arith.constant 0 : index
    %1 = vector.load %arg2[%c0_1, %c0_2] : memref<32x128xf32, #tpu.memory_space<vmem>>, vector<32x128xf32>
    %cst = arith.constant dense<0.000000e+00> : vector<8x128xf32>
    %2 = tpu.matmul %0, %1, %cst {dimension_numbers = #tpu.dot_dimension_numbers<[1], [0], [0], [1], [0, 0, 1, 1], [], []>, precision = #tpu.contract_precision<fp32>} : vector<8x32xf32>, vector<32x128xf32>, vector<8x128xf32> -> vector<8x128xf32>
    %c0_3 = arith.constant 0 : index
    %c0_4 = arith.constant 0 : index
    %3 = vector.load %arg3[%c0_3, %c0_4] : memref<1x128xf32, #tpu.memory_space<vmem>>, vector<1x128xf32>
    %4 = vector.broadcast %3 : vector<1x128xf32> to vector<8x128xf32>
    %5 = arith.addf %2, %4 : vector<8x128xf32>
    %cst_5 = arith.constant 0.000000e+00 : f32
    %6 = vector.broadcast %cst_5 : f32 to vector<8x128xf32>
    %7 = arith.maximumf %5, %6 : vector<8x128xf32>
    %c0_6 = arith.constant 0 : index
    %c0_7 = arith.constant 0 : index
    %8 = vector.load %arg4[%c0_6, %c0_7] : memref<128x64xf32, #tpu.memory_space<vmem>>, vector<128x64xf32>
    %cst_8 = arith.constant dense<0.000000e+00> : vector<8x64xf32>
    %9 = tpu.matmul %7, %8, %cst_8 {dimension_numbers = #tpu.dot_dimension_numbers<[1], [0], [0], [1], [0, 0, 1, 1], [], []>, precision = #tpu.contract_precision<fp32>} : vector<8x128xf32>, vector<128x64xf32>, vector<8x64xf32> -> vector<8x64xf32>
    %c0_9 = arith.constant 0 : index
    %c0_10 = arith.constant 0 : index
    %10 = vector.load %arg5[%c0_9, %c0_10] : memref<1x64xf32, #tpu.memory_space<vmem>>, vector<1x64xf32>
    %11 = vector.broadcast %10 : vector<1x64xf32> to vector<8x64xf32>
    %12 = arith.addf %9, %11 : vector<8x64xf32>
    %cst_11 = arith.constant 0.000000e+00 : f32
    %13 = vector.broadcast %cst_11 : f32 to vector<8x64xf32>
    %14 = arith.maximumf %12, %13 : vector<8x64xf32>
    %c0_12 = arith.constant 0 : index
    %c0_13 = arith.constant 0 : index
    %15 = vector.load %arg6[%c0_12, %c0_13] : memref<64x16xf32, #tpu.memory_space<vmem>>, vector<64x16xf32>
    %cst_14 = arith.constant dense<0.000000e+00> : vector<8x16xf32>
    %16 = tpu.matmul %14, %15, %cst_14 {dimension_numbers = #tpu.dot_dimension_numbers<[1], [0], [0], [1], [0, 0, 1, 1], [], []>, precision = #tpu.contract_precision<fp32>} : vector<8x64xf32>, vector<64x16xf32>, vector<8x16xf32> -> vector<8x16xf32>
    %c0_15 = arith.constant 0 : index
    %c0_16 = arith.constant 0 : index
    %17 = vector.load %arg7[%c0_15, %c0_16] : memref<1x16xf32, #tpu.memory_space<vmem>>, vector<1x16xf32>
    %18 = vector.broadcast %17 : vector<1x16xf32> to vector<8x16xf32>
    %19 = arith.addf %16, %18 : vector<8x16xf32>
    %c0_17 = arith.constant 0 : index
    %c0_18 = arith.constant 0 : index
    %20 = vector.load %arg8[%c0_17, %c0_18] : memref<8x16xf32, #tpu.memory_space<vmem>>, vector<8x16xf32>
    tpu.vector_store %arg8[%c0_17, %c0_18], %19 {strides = array<i32>} : memref<8x16xf32, #tpu.memory_space<vmem>>, vector<8x16xf32>,
    return
  }
  func.func @transform_0(%arg0: i32) -> (i32, i32) {
    %c0_i32 = arith.constant 0 : i32
    %c0_i32_0 = arith.constant 0 : i32
    return %arg0, %c0_i32 : i32, i32
  }
  func.func @transform_1(%arg0: i32) -> (i32, i32) {
    %c0_i32 = arith.constant 0 : i32
    %c0_i32_0 = arith.constant 0 : i32
    %c0_i32_1 = arith.constant 0 : i32
    return %c0_i32, %c0_i32_0 : i32, i32
  }
  func.func @transform_2(%arg0: i32) -> (i32, i32) {
    %c0_i32 = arith.constant 0 : i32
    %c0_i32_0 = arith.constant 0 : i32
    %c0_i32_1 = arith.constant 0 : i32
    return %c0_i32, %c0_i32_0 : i32, i32
  }
  func.func @transform_3(%arg0: i32) -> (i32, i32) {
    %c0_i32 = arith.constant 0 : i32
    %c0_i32_0 = arith.constant 0 : i32
    %c0_i32_1 = arith.constant 0 : i32
    return %c0_i32, %c0_i32_0 : i32, i32
  }
  func.func @transform_4(%arg0: i32) -> (i32, i32) {
    %c0_i32 = arith.constant 0 : i32
    %c0_i32_0 = arith.constant 0 : i32
    %c0_i32_1 = arith.constant 0 : i32
    return %c0_i32, %c0_i32_0 : i32, i32
  }
  func.func @transform_5(%arg0: i32) -> (i32, i32) {
    %c0_i32 = arith.constant 0 : i32
    %c0_i32_0 = arith.constant 0 : i32
    %c0_i32_1 = arith.constant 0 : i32
    return %c0_i32, %c0_i32_0 : i32, i32
  }
  func.func @transform_6(%arg0: i32) -> (i32, i32) {
    %c0_i32 = arith.constant 0 : i32
    %c0_i32_0 = arith.constant 0 : i32
    %c0_i32_1 = arith.constant 0 : i32
    return %c0_i32, %c0_i32_0 : i32, i32
  }
  func.func @transform_7(%arg0: i32) -> (i32, i32) {
    %c0_i32 = arith.constant 0 : i32
    %c0_i32_0 = arith.constant 0 : i32
    return %arg0, %c0_i32 : i32, i32
  }
}

</mosaic_0001>

<llo_original>
// kernel: tpu_custom_call.1
$region0: #{tpu_custom_call.1}
  #allocation0 [shape = 'u32[]', space=smem, size = 0x4, offset = 0x4, fixed_abs, tag = 'smem constant byte address 0x4 - core index']
  #allocation1 [shape = 'u32[144,128]{1,0:T(1,128)}', space=vmem, size = 0x12000, scoped, tag = 'internal scratch']
  %s0 = inlined_call_operand.vmem [shape: f32[8,32], index: 0, kind: input, shape index: {}]
  %s1 = inlined_call_operand.vmem [shape: f32[32,128], index: 1, kind: input, shape index: {}]
  %s2 = inlined_call_operand.vmem [shape: f32[1,128], index: 2, kind: input, shape index: {}]
  %s3 = inlined_call_operand.vmem [shape: f32[128,64], index: 3, kind: input, shape index: {}]
  %s4 = inlined_call_operand.vmem [shape: f32[1,64], index: 4, kind: input, shape index: {}]
  %s5 = inlined_call_operand.vmem [shape: f32[64,16], index: 5, kind: input, shape index: {}]
  %s6 = inlined_call_operand.vmem [shape: f32[1,16], index: 6, kind: input, shape index: {}]
  %s7 = inlined_call_operand.hbm [shape: f32[8,16], index: 7, kind: output, shape index: {}]
  %s8 = sld [smem:[#allocation0]]
  $region38: #{tpu_custom_call.1} parent=0
    _
  %s10 = ssub.s32 1, %s8
  %s11 = scalar_select 0, %s10, %s8
  $region1: #{tpu_custom_call.1} parent=0
    #allocation2 [shape = 'u8[4096]{0}', space=vmem, size = 0x1000, scoped, tag = 'output window, operand 0, single buffered']
    #allocation3 [shape = 's32[1]{0}', space=sflag, size = 0x4, scoped, tag = 'scoped memory for tpu_custom_call.1']
    %12 = vsyncpa [#allocation3], 0
    // Predicated region
    $region2: #{tpu_custom_call.1} parent=1 // pred_check
      _
    $region3: #{tpu_custom_call.1} parent=1 // pred_check_branch
      %14 = sbr.rel (0) target = $region5
    $region4: #{tpu_custom_call.1} parent=1 // pred_region
      _
    $region5: #{tpu_custom_call.1} parent=1 // pred_fallthru
      _
    // Predicated region
    $region6: #{tpu_custom_call.1} parent=1 // pred_check
      _
    $region7: #{tpu_custom_call.1} parent=1 // pred_check_branch
      %16 = sbr.rel (0) target = $region9
    $region8: #{tpu_custom_call.1} parent=1 // pred_region
      _
    $region9: #{tpu_custom_call.1} parent=1 // pred_fallthru
      _
    // Predicated region
    $region10: #{tpu_custom_call.1} parent=1 // pred_check
      _
    $region11: #{tpu_custom_call.1} parent=1 // pred_check_branch
      %18 = sbr.rel (0) target = $region13
    $region12: #{tpu_custom_call.1} parent=1 // pred_region
      _
    $region13: #{tpu_custom_call.1} parent=1 // pred_fallthru
      _
    // Predicated region
    $region14: #{tpu_custom_call.1} parent=1 // pred_check
      _
    $region15: #{tpu_custom_call.1} parent=1 // pred_check_branch
      %20 = sbr.rel (0) target = $region17
    $region16: #{tpu_custom_call.1} parent=1 // pred_region
      _
    $region17: #{tpu_custom_call.1} parent=1 // pred_fallthru
      _
    // Predicated region
    $region18: #{tpu_custom_call.1} parent=1 // pred_check
      _
    $region19: #{tpu_custom_call.1} parent=1 // pred_check_branch
      %22 = sbr.rel (0) target = $region21
    $region20: #{tpu_custom_call.1} parent=1 // pred_region
      _
    $region21: #{tpu_custom_call.1} parent=1 // pred_fallthru
      _
    // Predicated region
    $region22: #{tpu_custom_call.1} parent=1 // pred_check
      _
    $region23: #{tpu_custom_call.1} parent=1 // pred_check_branch
      %24 = sbr.rel (0) target = $region25
    $region24: #{tpu_custom_call.1} parent=1 // pred_region
      _
    $region25: #{tpu_custom_call.1} parent=1 // pred_fallthru
      _
    // Predicated region
    $region26: #{tpu_custom_call.1} parent=1 // pred_check
      _
    $region27: #{tpu_custom_call.1} parent=1 // pred_check_branch
      %26 = sbr.rel (0) target = $region29
    $region28: #{tpu_custom_call.1} parent=1 // pred_region
      _
    $region29: #{tpu_custom_call.1} parent=1 // pred_fallthru
      _
    %v27 = vld [vmem:[%s0] sm:$0xff]
    %v28 = vld [vmem:[%s1] sm:$0xff]
    %v29 = vld [vmem:[%s1 + $0x8] sm:$0xff]
    %v30 = vld [vmem:[%s1 + $0x10] sm:$0xff]
    %v31 = vld [vmem:[%s1 + $0x18] sm:$0xff]
    %v32 = vld [vmem:[%s2] sm:$0x1]
    %v34 = vlaneseq
    %v35 = vshrl.u32 %v34, 7
    %v36 = vsub.s32 0, %v35
    %v37 = vrot.slane %v32, %v36
    %vm39 = vcmask 261120
    %v41 = vsel %vm39, %v27, 0
    %43 = vmatprep.subr.mxu0 0.0
    %44 = vmatpush1.msra.mxu0 0.0
    %45 = vmatprep.subr.mxu0 0.0
    %46 = vmatpush1.msra.mxu0 0.0
    %47 = vmatprep.subr.mxu0 0.0
    %48 = vmatpush1.msra.mxu0 0.0
    %49 = vmatprep.subr.mxu0 0.0
    %50 = vmatpush1.msra.mxu0 0.0
    %51 = vmatprep.subr.mxu0 0.0
    %52 = vmatpush1.msra.mxu0 0.0
    %53 = vmatprep.subr.mxu0 0.0
    %54 = vmatpush1.msra.mxu0 0.0
    %55 = vmatprep.subr.mxu0 0.0
    %56 = vmatpush1.msra.mxu0 0.0
    %57 = vmatprep.subr.mxu0 0.0
    %58 = vmatpush1.msra.mxu0 0.0
    %59 = vmatprep.subr.mxu0 0.0
    %60 = vmatpush1.msra.mxu0 0.0
    %61 = vmatprep.subr.mxu0 0.0
    %62 = vmatpush1.msra.mxu0 0.0
    %63 = vmatprep.subr.mxu0 0.0
    %64 = vmatpush1.msra.mxu0 0.0
    %65 = vmatprep.subr.mxu0 0.0
    %66 = vmatpush1.msra.mxu0 0.0
    %67 = vmatprep.subr.mxu0 0.0
    %v68 = vand.u32 %v31, 4294901760
    %69 = vmatpush1.msra.mxu0 %v68
    %70 = vmatprep.subr.mxu0 0.0
    %v71 = vand.u32 %v30, 4294901760
    %72 = vmatpush1.msra.mxu0 %v71
    %73 = vmatprep.subr.mxu0 0.0
    %v74 = vand.u32 %v29, 4294901760
    %75 = vmatpush1.msra.mxu0 %v74
    %76 = vmatprep.subr.mxu0 0.0
    %v77 = vand.u32 %v28, 4294901760
    %78 = vmatpush1.msra.mxu0 %v77
    %79 = vmatprep.subr.mxu0 0.0
    %80 = vmatpush2.msra.mxu0 0.0
    %81 = vmatprep.subr.mxu0 0.0
    %82 = vmatpush2.msra.mxu0 0.0
    %83 = vmatprep.subr.mxu0 0.0
    %84 = vmatpush2.msra.mxu0 0.0
    %85 = vmatprep.subr.mxu0 0.0
    %86 = vmatpush2.msra.mxu0 0.0
    %87 = vmatprep.subr.mxu0 0.0
    %88 = vmatpush2.msra.mxu0 0.0
    %89 = vmatprep.subr.mxu0 0.0
    %90 = vmatpush2.msra.mxu0 0.0
    %91 = vmatprep.subr.mxu0 0.0
    %92 = vmatpush2.msra.mxu0 0.0
    %93 = vmatprep.subr.mxu0 0.0
    %94 = vmatpush2.msra.mxu0 0.0
    %95 = vmatprep.subr.mxu0 0.0
    %96 = vmatpush2.msra.mxu0 0.0
    %97 = vmatprep.subr.mxu0 0.0
    %98 = vmatpush2.msra.mxu0 0.0
    %99 = vmatprep.subr.mxu0 0.0
    %100 = vmatpush2.msra.mxu0 0.0
    %101 = vmatprep.subr.mxu0 0.0
    %102 = vmatpush2.msra.mxu0 0.0
    %103 = vmatprep.subr.mxu0 0.0
    %104 = vmatpush2.msra.mxu0 0.0
    %105 = vmatprep.subr.mxu0 0.0
    %106 = vmatpush2.msra.mxu0 0.0
    %107 = vmatprep.subr.mxu0 0.0
    %108 = vmatpush2.msra.mxu0 0.0
    %109 = vmatprep.subr.mxu0 0.0
    %110 = vmatpush2.msra.mxu0 0.0
    %111 = vmatprep.mubr.f32.mxu0 0.0
    %v112 = vand.u32 %v41, 4294901760
    %v113 = vsub.f32 %v41, %v112
    %v114 = vand.u32 %v113, 4294901760
    %v115 = vsub.f32 %v113, %v114
    %v116 = vand.u32 %v115, 4294901760
    %117 = vmatmul.mubr.f32.gmra.mxu0 %v116
    %v118 = vpop.f32.mrf.mxu0
    %v119 = vadd.f32 %v37, %v118
    %v120 = vpop.f32.mrf.mxu0
    %121 = vdwg.mxu0
    %122 = vmatprep.subr.mxu0 0.0
    %123 = vmatpush1.msra.mxu0 0.0
    %124 = vmatprep.subr.mxu0 0.0
    %125 = vmatpush1.msra.mxu0 0.0
    %126 = vmatprep.subr.mxu0 0.0
    %127 = vmatpush1.msra.mxu0 0.0
    %128 = vmatprep.subr.mxu0 0.0
    %129 = vmatpush1.msra.mxu0 0.0
    %130 = vmatprep.subr.mxu0 0.0
    %131 = vmatpush1.msra.mxu0 0.0
    %132 = vmatprep.subr.mxu0 0.0
    %133 = vmatpush1.msra.mxu0 0.0
    %134 = vmatprep.subr.mxu0 0.0
    %135 = vmatpush1.msra.mxu0 0.0
    %136 = vmatprep.subr.mxu0 0.0
    %137 = vmatpush1.msra.mxu0 0.0
    %138 = vmatprep.subr.mxu0 0.0
    %139 = vmatpush1.msra.mxu0 0.0
    %140 = vmatprep.subr.mxu0 0.0
    %141 = vmatpush1.msra.mxu0 0.0
    %142 = vmatprep.subr.mxu0 0.0
    %143 = vmatpush1.msra.mxu0 0.0
    %144 = vmatprep.subr.mxu0 0.0
    %145 = vmatpush1.msra.mxu0 0.0
    %146 = vmatprep.subr.mxu0 0.0
    %v147 = vand.u32 %v31, 4294901760
    %v148 = vsub.f32 %v31, %v147
    %v149 = vand.u32 %v148, 4294901760
    %v150 = vsub.f32 %v148, %v149
    %v151 = vand.u32 %v150, 4294901760
    %152 = vmatpush1.msra.mxu0 %v151
    %153 = vmatprep.subr.mxu0 0.0
    %v154 = vand.u32 %v30, 4294901760
    %v155 = vsub.f32 %v30, %v154
    %v156 = vand.u32 %v155, 4294901760
    %v157 = vsub.f32 %v155, %v156
    %v158 = vand.u32 %v157, 4294901760
    %159 = vmatpush1.msra.mxu0 %v158
    %160 = vmatprep.subr.mxu0 0.0
    %v161 = vand.u32 %v29, 4294901760
    %v162 = vsub.f32 %v29, %v161
    %v163 = vand.u32 %v162, 4294901760
    %v164 = vsub.f32 %v162, %v163
    %v165 = vand.u32 %v164, 4294901760
    %166 = vmatpush1.msra.mxu0 %v165
    %167 = vmatprep.subr.mxu0 0.0
    %v168 = vand.u32 %v28, 4294901760
    %v169 = vsub.f32 %v28, %v168
    %v170 = vand.u32 %v169, 4294901760
    %v171 = vsub.f32 %v169, %v170
    %v172 = vand.u32 %v171, 4294901760
    %173 = vmatpush1.msra.mxu0 %v172
    %174 = vmatprep.subr.mxu0 0.0
    %175 = vmatpush2.msra.mxu0 0.0
    %176 = vmatprep.subr.mxu0 0.0
    %177 = vmatpush2.msra.mxu0 0.0
    %178 = vmatprep.subr.mxu0 0.0
    %179 = vmatpush2.msra.mxu0 0.0
    %180 = vmatprep.subr.mxu0 0.0
    %181 = vmatpush2.msra.mxu0 0.0
    %182 = vmatprep.subr.mxu0 0.0
    %183 = vmatpush2.msra.mxu0 0.0
    %184 = vmatprep.subr.mxu0 0.0
    %185 = vmatpush2.msra.mxu0 0.0
    %186 = vmatprep.subr.mxu0 0.0
    %187 = vmatpush2.msra.mxu0 0.0
    %188 = vmatprep.subr.mxu0 0.0
    %189 = vmatpush2.msra.mxu0 0.0
    %190 = vmatprep.subr.mxu0 0.0
    %191 = vmatpush2.msra.mxu0 0.0
    %192 = vmatprep.subr.mxu0 0.0
    %193 = vmatpush2.msra.mxu0 0.0
    %194 = vmatprep.subr.mxu0 0.0
    %195 = vmatpush2.msra.mxu0 0.0
    %196 = vmatprep.subr.mxu0 0.0
    %197 = vmatpush2.msra.mxu0 0.0
    %198 = vmatprep.subr.mxu0 0.0
    %199 = vmatpush2.msra.mxu0 0.0
    %200 = vmatprep.subr.mxu0 0.0
    %201 = vmatpush2.msra.mxu0 0.0
    %202 = vmatprep.subr.mxu0 0.0
    %203 = vmatpush2.msra.mxu0 0.0
    %204 = vmatprep.subr.mxu0 0.0
    %205 = vmatpush2.msra.mxu0 0.0
    %206 = vmatprep.mubr.f32.mxu0 0.0
    %v207 = vand.u32 %v41, 4294901760
    %208 = vmatmul.mubr.f32.gmra.mxu0 %v207
    %v209 = vpop.f32.mrf.mxu0
    %v210 = vadd.f32 %v119, %v209
    %v211 = vpop.f32.mrf.mxu0
    %212 = vdwg.mxu0
    %213 = vmatprep.subr.mxu0 0.0
    %214 = vmatpush1.msra.mxu0 0.0
    %215 = vmatprep.subr.mxu0 0.0
    %216 = vmatpush1.msra.mxu0 0.0
    %217 = vmatprep.subr.mxu0 0.0
    %218 = vmatpush1.msra.mxu0 0.0
    %219 = vmatprep.subr.mxu0 0.0
    %220 = vmatpush1.msra.mxu0 0.0
    %221 = vmatprep.subr.mxu0 0.0
    %222 = vmatpush1.msra.mxu0 0.0
    %223 = vmatprep.subr.mxu0 0.0
    %224 = vmatpush1.msra.mxu0 0.0
    %225 = vmatprep.subr.mxu0 0.0
    %226 = vmatpush1.msra.mxu0 0.0
    %227 = vmatprep.subr.mxu0 0.0
    %228 = vmatpush1.msra.mxu0 0.0
    %229 = vmatprep.subr.mxu0 0.0
    %230 = vmatpush1.msra.mxu0 0.0
    %231 = vmatprep.subr.mxu0 0.0
    %232 = vmatpush1.msra.mxu0 0.0
    %233 = vmatprep.subr.mxu0 0.0
    %234 = vmatpush1.msra.mxu0 0.0
    %235 = vmatprep.subr.mxu0 0.0
    %236 = vmatpush1.msra.mxu0 0.0
    %237 = vmatprep.subr.mxu0 0.0
    %v238 = vand.u32 %v31, 4294901760
    %v239 = vsub.f32 %v31, %v238
    %240 = vmatpush1.msra.mxu0 %v239
    %241 = vmatprep.subr.mxu0 0.0
    %v242 = vand.u32 %v30, 4294901760
    %v243 = vsub.f32 %v30, %v242
    %244 = vmatpush1.msra.mxu0 %v243
    %245 = vmatprep.subr.mxu0 0.0
    %v246 = vand.u32 %v29, 4294901760
    %v247 = vsub.f32 %v29, %v246
    %248 = vmatpush1.msra.mxu0 %v247
    %249 = vmatprep.subr.mxu0 0.0
    %v250 = vand.u32 %v28, 4294901760
    %v251 = vsub.f32 %v28, %v250
    %252 = vmatpush1.msra.mxu0 %v251
    %253 = vmatprep.subr.mxu0 0.0
    %254 = vmatpush2.msra.mxu0 0.0
    %255 = vmatprep.subr.mxu0 0.0
    %256 = vmatpush2.msra.mxu0 0.0
    %257 = vmatprep.subr.mxu0 0.0
    %258 = vmatpush2.msra.mxu0 0.0
    %259 = vmatprep.subr.mxu0 0.0
    %260 = vmatpush2.msra.mxu0 0.0
    %261 = vmatprep.subr.mxu0 0.0
    %262 = vmatpush2.msra.mxu0 0.0
    %263 = vmatprep.subr.mxu0 0.0
    %264 = vmatpush2.msra.mxu0 0.0
    %265 = vmatprep.subr.mxu0 0.0
    %266 = vmatpush2.msra.mxu0 0.0
    %267 = vmatprep.subr.mxu0 0.0
    %268 = vmatpush2.msra.mxu0 0.0
    %269 = vmatprep.subr.mxu0 0.0
    %270 = vmatpush2.msra.mxu0 0.0
    %271 = vmatprep.subr.mxu0 0.0
    %272 = vmatpush2.msra.mxu0 0.0
    %273 = vmatprep.subr.mxu0 0.0
    %274 = vmatpush2.msra.mxu0 0.0
    %275 = vmatprep.subr.mxu0 0.0
    %276 = vmatpush2.msra.mxu0 0.0
    %277 = vmatprep.subr.mxu0 0.0
    %278 = vmatpush2.msra.mxu0 0.0
    %279 = vmatprep.subr.mxu0 0.0
    %280 = vmatpush2.msra.mxu0 0.0
    %281 = vmatprep.subr.mxu0 0.0
    %282 = vmatpush2.msra.mxu0 0.0
    %283 = vmatprep.subr.mxu0 0.0
    %284 = vmatpush2.msra.mxu0 0.0
    %285 = vmatprep.mubr.f32.mxu0 0.0
    %v286 = vand.u32 %v41, 4294901760
    %v287 = vsub.f32 %v41, %v286
    %288 = vmatmul.mubr.f32.gmra.mxu0 %v287
    %v289 = vpop.f32.mrf.mxu0
    %v290 = vadd.f32 %v210, %v289
    %v291 = vpop.f32.mrf.mxu0
    %292 = vdwg.mxu0
    %293 = vmatprep.subr.mxu0 0.0
    %294 = vmatpush1.msra.mxu0 0.0
    %295 = vmatprep.subr.mxu0 0.0
    %296 = vmatpush1.msra.mxu0 0.0
    %297 = vmatprep.subr.mxu0 0.0
    %298 = vmatpush1.msra.mxu0 0.0
    %299 = vmatprep.subr.mxu0 0.0
    %300 = vmatpush1.msra.mxu0 0.0
    %301 = vmatprep.subr.mxu0 0.0
    %302 = vmatpush1.msra.mxu0 0.0
    %303 = vmatprep.subr.mxu0 0.0
    %304 = vmatpush1.msra.mxu0 0.0
    %305 = vmatprep.subr.mxu0 0.0
    %306 = vmatpush1.msra.mxu0 0.0
    %307 = vmatprep.subr.mxu0 0.0
    %308 = vmatpush1.msra.mxu0 0.0
    %309 = vmatprep.subr.mxu0 0.0
    %310 = vmatpush1.msra.mxu0 0.0
    %311 = vmatprep.subr.mxu0 0.0
    %312 = vmatpush1.msra.mxu0 0.0
    %313 = vmatprep.subr.mxu0 0.0
    %314 = vmatpush1.msra.mxu0 0.0
    %315 = vmatprep.subr.mxu0 0.0
    %316 = vmatpush1.msra.mxu0 0.0
    %317 = vmatprep.subr.mxu0 0.0
    %v318 = vand.u32 %v31, 4294901760
    %319 = vmatpush1.msra.mxu0 %v318
    %320 = vmatprep.subr.mxu0 0.0
    %v321 = vand.u32 %v30, 4294901760
    %322 = vmatpush1.msra.mxu0 %v321
    %323 = vmatprep.subr.mxu0 0.0
    %v324 = vand.u32 %v29, 4294901760
    %325 = vmatpush1.msra.mxu0 %v324
    %326 = vmatprep.subr.mxu0 0.0
    %v327 = vand.u32 %v28, 4294901760
    %328 = vmatpush1.msra.mxu0 %v327
    %329 = vmatprep.subr.mxu0 0.0
    %330 = vmatpush2.msra.mxu0 0.0
    %331 = vmatprep.subr.mxu0 0.0
    %332 = vmatpush2.msra.mxu0 0.0
    %333 = vmatprep.subr.mxu0 0.0
    %334 = vmatpush2.msra.mxu0 0.0
    %335 = vmatprep.subr.mxu0 0.0
    %336 = vmatpush2.msra.mxu0 0.0
    %337 = vmatprep.subr.mxu0 0.0
    %338 = vmatpush2.msra.mxu0 0.0
    %339 = vmatprep.subr.mxu0 0.0
    %340 = vmatpush2.msra.mxu0 0.0
    %341 = vmatprep.subr.mxu0 0.0
    %342 = vmatpush2.msra.mxu0 0.0
    %343 = vmatprep.subr.mxu0 0.0
    %344 = vmatpush2.msra.mxu0 0.0
    %345 = vmatprep.subr.mxu0 0.0
    %346 = vmatpush2.msra.mxu0 0.0
    %347 = vmatprep.subr.mxu0 0.0
    %348 = vmatpush2.msra.mxu0 0.0
    %349 = vmatprep.subr.mxu0 0.0
    %350 = vmatpush2.msra.mxu0 0.0
    %351 = vmatprep.subr.mxu0 0.0
    %352 = vmatpush2.msra.mxu0 0.0
    %353 = vmatprep.subr.mxu0 0.0
    %354 = vmatpush2.msra.mxu0 0.0
    %355 = vmatprep.subr.mxu0 0.0
    %356 = vmatpush2.msra.mxu0 0.0
    %357 = vmatprep.subr.mxu0 0.0
    %358 = vmatpush2.msra.mxu0 0.0
    %359 = vmatprep.subr.mxu0 0.0
    %360 = vmatpush2.msra.mxu0 0.0
    %361 = vmatprep.mubr.f32.mxu0 0.0
    %v362 = vand.u32 %v41, 4294901760
    %v363 = vsub.f32 %v41, %v362
    %v364 = vand.u32 %v363, 4294901760
    %365 = vmatmul.mubr.f32.gmra.mxu0 %v364
    %v366 = vpop.f32.mrf.mxu0
    %v367 = vadd.f32 %v290, %v366
    %v368 = vpop.f32.mrf.mxu0
    %369 = vdwg.mxu0
    %370 = vmatprep.subr.mxu0 0.0
    %371 = vmatpush1.msra.mxu0 0.0
    %372 = vmatprep.subr.mxu0 0.0
    %373 = vmatpush1.msra.mxu0 0.0
    %374 = vmatprep.subr.mxu0 0.0
    %375 = vmatpush1.msra.mxu0 0.0
    %376 = vmatprep.subr.mxu0 0.0
    %377 = vmatpush1.msra.mxu0 0.0
    %378 = vmatprep.subr.mxu0 0.0
    %379 = vmatpush1.msra.mxu0 0.0
    %380 = vmatprep.subr.mxu0 0.0
    %381 = vmatpush1.msra.mxu0 0.0
    %382 = vmatprep.subr.mxu0 0.0
    %383 = vmatpush1.msra.mxu0 0.0
    %384 = vmatprep.subr.mxu0 0.0
    %385 = vmatpush1.msra.mxu0 0.0
    %386 = vmatprep.subr.mxu0 0.0
    %387 = vmatpush1.msra.mxu0 0.0
    %388 = vmatprep.subr.mxu0 0.0
    %389 = vmatpush1.msra.mxu0 0.0
    %390 = vmatprep.subr.mxu0 0.0
    %391 = vmatpush1.msra.mxu0 0.0
    %392 = vmatprep.subr.mxu0 0.0
    %393 = vmatpush1.msra.mxu0 0.0
    %394 = vmatprep.subr.mxu0 0.0
    %v395 = vand.u32 %v31, 4294901760
    %v396 = vsub.f32 %v31, %v395
    %v397 = vand.u32 %v396, 4294901760
    %398 = vmatpush1.msra.mxu0 %v397
    %399 = vmatprep.subr.mxu0 0.0
    %v400 = vand.u32 %v30, 4294901760
    %v401 = vsub.f32 %v30, %v400
    %v402 = vand.u32 %v401, 4294901760
    %403 = vmatpush1.msra.mxu0 %v402
    %404 = vmatprep.subr.mxu0 0.0
    %v405 = vand.u32 %v29, 4294901760
    %v406 = vsub.f32 %v29, %v405
    %v407 = vand.u32 %v406, 4294901760
    %408 = vmatpush1.msra.mxu0 %v407
    %409 = vmatprep.subr.mxu0 0.0
    %v410 = vand.u32 %v28, 4294901760
    %v411 = vsub.f32 %v28, %v410
    %v412 = vand.u32 %v411, 4294901760
    %413 = vmatpush1.msra.mxu0 %v412
    %414 = vmatprep.subr.mxu0 0.0
    %415 = vmatpush2.msra.mxu0 0.0
    %416 = vmatprep.subr.mxu0 0.0
    %417 = vmatpush2.msra.mxu0 0.0
    %418 = vmatprep.subr.mxu0 0.0
    %419 = vmatpush2.msra.mxu0 0.0
    %420 = vmatprep.subr.mxu0 0.0
    %421 = vmatpush2.msra.mxu0 0.0
    %422 = vmatprep.subr.mxu0 0.0
    %423 = vmatpush2.msra.mxu0 0.0
    %424 = vmatprep.subr.mxu0 0.0
    %425 = vmatpush2.msra.mxu0 0.0
    %426 = vmatprep.subr.mxu0 0.0
    %427 = vmatpush2.msra.mxu0 0.0
    %428 = vmatprep.subr.mxu0 0.0
    %429 = vmatpush2.msra.mxu0 0.0
    %430 = vmatprep.subr.mxu0 0.0
    %431 = vmatpush2.msra.mxu0 0.0
    %432 = vmatprep.subr.mxu0 0.0
    %433 = vmatpush2.msra.mxu0 0.0
    %434 = vmatprep.subr.mxu0 0.0
    %435 = vmatpush2.msra.mxu0 0.0
    %436 = vmatprep.subr.mxu0 0.0
    %437 = vmatpush2.msra.mxu0 0.0
    %438 = vmatprep.subr.mxu0 0.0
    %439 = vmatpush2.msra.mxu0 0.0
    %440 = vmatprep.subr.mxu0 0.0
    %441 = vmatpush2.msra.mxu0 0.0
    %442 = vmatprep.subr.mxu0 0.0
    %443 = vmatpush2.msra.mxu0 0.0
    %444 = vmatprep.subr.mxu0 0.0
    %445 = vmatpush2.msra.mxu0 0.0
    %446 = vmatprep.mubr.f32.mxu0 0.0
    %v447 = vand.u32 %v41, 4294901760
    %448 = vmatmul.mubr.f32.gmra.mxu0 %v447
    %v449 = vpop.f32.mrf.mxu0
    %v450 = vadd.f32 %v367, %v449
    %v451 = vpop.f32.mrf.mxu0
    %452 = vdwg.mxu0
    %453 = vmatprep.subr.mxu0 0.0
    %454 = vmatpush1.msra.mxu0 0.0
    %455 = vmatprep.subr.mxu0 0.0
    %456 = vmatpush1.msra.mxu0 0.0
    %457 = vmatprep.subr.mxu0 0.0
    %458 = vmatpush1.msra.mxu0 0.0
    %459 = vmatprep.subr.mxu0 0.0
    %460 = vmatpush1.msra.mxu0 0.0
    %461 = vmatprep.subr.mxu0 0.0
    %462 = vmatpush1.msra.mxu0 0.0
    %463 = vmatprep.subr.mxu0 0.0
    %464 = vmatpush1.msra.mxu0 0.0
    %465 = vmatprep.subr.mxu0 0.0
    %466 = vmatpush1.msra.mxu0 0.0
    %467 = vmatprep.subr.mxu0 0.0
    %468 = vmatpush1.msra.mxu0 0.0
    %469 = vmatprep.subr.mxu0 0.0
    %470 = vmatpush1.msra.mxu0 0.0
    %471 = vmatprep.subr.mxu0 0.0
    %472 = vmatpush1.msra.mxu0 0.0
    %473 = vmatprep.subr.mxu0 0.0
    %474 = vmatpush1.msra.mxu0 0.0
    %475 = vmatprep.subr.mxu0 0.0
    %476 = vmatpush1.msra.mxu0 0.0
    %477 = vmatprep.subr.mxu0 0.0
    %v478 = vand.u32 %v31, 4294901760
    %479 = vmatpush1.msra.mxu0 %v478
    %480 = vmatprep.subr.mxu0 0.0
    %v481 = vand.u32 %v30, 4294901760
    %482 = vmatpush1.msra.mxu0 %v481
    %483 = vmatprep.subr.mxu0 0.0
    %v484 = vand.u32 %v29, 4294901760
    %485 = vmatpush1.msra.mxu0 %v484
    %486 = vmatprep.subr.mxu0 0.0
    %v487 = vand.u32 %v28, 4294901760
    %488 = vmatpush1.msra.mxu0 %v487
    %489 = vmatprep.subr.mxu0 0.0
    %490 = vmatpush2.msra.mxu0 0.0
    %491 = vmatprep.subr.mxu0 0.0
    %492 = vmatpush2.msra.mxu0 0.0
    %493 = vmatprep.subr.mxu0 0.0
    %494 = vmatpush2.msra.mxu0 0.0
    %495 = vmatprep.subr.mxu0 0.0
    %496 = vmatpush2.msra.mxu0 0.0
    %497 = vmatprep.subr.mxu0 0.0
    %498 = vmatpush2.msra.mxu0 0.0
    %499 = vmatprep.subr.mxu0 0.0
    %500 = vmatpush2.msra.mxu0 0.0
    %501 = vmatprep.subr.mxu0 0.0
    %502 = vmatpush2.msra.mxu0 0.0
    %503 = vmatprep.subr.mxu0 0.0
    %504 = vmatpush2.msra.mxu0 0.0
    %505 = vmatprep.subr.mxu0 0.0
    %506 = vmatpush2.msra.mxu0 0.0
    %507 = vmatprep.subr.mxu0 0.0
    %508 = vmatpush2.msra.mxu0 0.0
    %509 = vmatprep.subr.mxu0 0.0
    %510 = vmatpush2.msra.mxu0 0.0
    %511 = vmatprep.subr.mxu0 0.0
    %512 = vmatpush2.msra.mxu0 0.0
    %513 = vmatprep.subr.mxu0 0.0
    %514 = vmatpush2.msra.mxu0 0.0
    %515 = vmatprep.subr.mxu0 0.0
    %516 = vmatpush2.msra.mxu0 0.0
    %517 = vmatprep.subr.mxu0 0.0
    %518 = vmatpush2.msra.mxu0 0.0
    %519 = vmatprep.subr.mxu0 0.0
    %520 = vmatpush2.msra.mxu0 0.0
    %521 = vmatprep.mubr.f32.mxu0 0.0
    %v522 = vand.u32 %v41, 4294901760
    %523 = vmatmul.mubr.f32.gmra.mxu0 %v522
    %v524 = vpop.f32.mrf.mxu0
    %v525 = vadd.f32 %v450, %v524
    %v526 = vpop.f32.mrf.mxu0
    %527 = vdwg.mxu0
    %v528 = vmax.f32 %v525, 0.0
    %v529 = vld [vmem:[%s3] sm:$0xff]
    %v530 = vld [vmem:[%s3 + $0x8] sm:$0xff]
    %v531 = vld [vmem:[%s3 + $0x10] sm:$0xff]
    %v532 = vld [vmem:[%s3 + $0x18] sm:$0xff]
    %v533 = vld [vmem:[%s3 + $0x20] sm:$0xff]
    %v534 = vld [vmem:[%s3 + $0x28] sm:$0xff]
    %v535 = vld [vmem:[%s3 + $0x30] sm:$0xff]
    %v536 = vld [vmem:[%s3 + $0x38] sm:$0xff]
    %v537 = vld [vmem:[%s3 + $0x40] sm:$0xff]
    %v538 = vld [vmem:[%s3 + $0x48] sm:$0xff]
    %v539 = vld [vmem:[%s3 + $0x50] sm:$0xff]
    %v540 = vld [vmem:[%s3 + $0x58] sm:$0xff]
    %v541 = vld [vmem:[%s3 + $0x60] sm:$0xff]
    %v542 = vld [vmem:[%s3 + $0x68] sm:$0xff]
    %v543 = vld [vmem:[%s3 + $0x70] sm:$0xff]
    %v544 = vld [vmem:[%s3 + $0x78] sm:$0xff]
    %v545 = vld [vmem:[%s4] sm:$0x1]
    %v547 = vlaneseq
    %v548 = vshrl.u32 %v547, 7
    %v549 = vsub.s32 0, %v548
    %v550 = vrot.slane %v545, %v549
    %552 = vmatprep.subr.mxu0 0.0
    %v553 = vand.u32 %v544, 4294901760
    %554 = vmatpush1.msra.mxu0 %v553
    %555 = vmatprep.subr.mxu0 0.0
    %v556 = vand.u32 %v543, 4294901760
    %557 = vmatpush1.msra.mxu0 %v556
    %558 = vmatprep.subr.mxu0 0.0
    %v559 = vand.u32 %v542, 4294901760
    %560 = vmatpush1.msra.mxu0 %v559
    %561 = vmatprep.subr.mxu0 0.0
    %v562 = vand.u32 %v541, 4294901760
    %563 = vmatpush1.msra.mxu0 %v562
    %564 = vmatprep.subr.mxu0 0.0
    %v565 = vand.u32 %v540, 4294901760
    %566 = vmatpush1.msra.mxu0 %v565
    %567 = vmatprep.subr.mxu0 0.0
    %v568 = vand.u32 %v539, 4294901760
    %569 = vmatpush1.msra.mxu0 %v568
    %570 = vmatprep.subr.mxu0 0.0
    %v571 = vand.u32 %v538, 4294901760
    %572 = vmatpush1.msra.mxu0 %v571
    %573 = vmatprep.subr.mxu0 0.0
    %v574 = vand.u32 %v537, 4294901760
    %575 = vmatpush1.msra.mxu0 %v574
    %576 = vmatprep.subr.mxu0 0.0
    %v577 = vand.u32 %v536, 4294901760
    %578 = vmatpush1.msra.mxu0 %v577
    %579 = vmatprep.subr.mxu0 0.0
    %v580 = vand.u32 %v535, 4294901760
    %581 = vmatpush1.msra.mxu0 %v580
    %582 = vmatprep.subr.mxu0 0.0
    %v583 = vand.u32 %v534, 4294901760
    %584 = vmatpush1.msra.mxu0 %v583
    %585 = vmatprep.subr.mxu0 0.0
    %v586 = vand.u32 %v533, 4294901760
    %587 = vmatpush1.msra.mxu0 %v586
    %588 = vmatprep.subr.mxu0 0.0
    %v589 = vand.u32 %v532, 4294901760
    %590 = vmatpush1.msra.mxu0 %v589
    %591 = vmatprep.subr.mxu0 0.0
    %v592 = vand.u32 %v531, 4294901760
    %593 = vmatpush1.msra.mxu0 %v592
    %594 = vmatprep.subr.mxu0 0.0
    %v595 = vand.u32 %v530, 4294901760
    %596 = vmatpush1.msra.mxu0 %v595
    %597 = vmatprep.subr.mxu0 0.0
    %v598 = vand.u32 %v529, 4294901760
    %599 = vmatpush1.msra.mxu0 %v598
    %600 = vmatprep.subr.mxu0 0.0
    %601 = vmatpush2.msra.mxu0 0.0
    %602 = vmatprep.subr.mxu0 0.0
    %603 = vmatpush2.msra.mxu0 0.0
    %604 = vmatprep.subr.mxu0 0.0
    %605 = vmatpush2.msra.mxu0 0.0
    %606 = vmatprep.subr.mxu0 0.0
    %607 = vmatpush2.msra.mxu0 0.0
    %608 = vmatprep.subr.mxu0 0.0
    %609 = vmatpush2.msra.mxu0 0.0
    %610 = vmatprep.subr.mxu0 0.0
    %611 = vmatpush2.msra.mxu0 0.0
    %612 = vmatprep.subr.mxu0 0.0
    %613 = vmatpush2.msra.mxu0 0.0
    %614 = vmatprep.subr.mxu0 0.0
    %615 = vmatpush2.msra.mxu0 0.0
    %616 = vmatprep.subr.mxu0 0.0
    %617 = vmatpush2.msra.mxu0 0.0
    %618 = vmatprep.subr.mxu0 0.0
    %619 = vmatpush2.msra.mxu0 0.0
    %620 = vmatprep.subr.mxu0 0.0
    %621 = vmatpush2.msra.mxu0 0.0
    %622 = vmatprep.subr.mxu0 0.0
    %623 = vmatpush2.msra.mxu0 0.0
    %624 = vmatprep.subr.mxu0 0.0
    %625 = vmatpush2.msra.mxu0 0.0
    %626 = vmatprep.subr.mxu0 0.0
    %627 = vmatpush2.msra.mxu0 0.0
    %628 = vmatprep.subr.mxu0 0.0
    %629 = vmatpush2.msra.mxu0 0.0
    %630 = vmatprep.subr.mxu0 0.0
    %631 = vmatpush2.msra.mxu0 0.0
    %632 = vmatprep.mubr.f32.mxu0 0.0
    %v633 = vand.u32 %v528, 4294901760
    %v634 = vsub.f32 %v528, %v633
    %v635 = vand.u32 %v634, 4294901760
    %v636 = vsub.f32 %v634, %v635
    %v637 = vand.u32 %v636, 4294901760
    %638 = vmatmul.mubr.f32.gmra.mxu0 %v637
    %v639 = vpop.f32.mrf.mxu0
    %v640 = vadd.f32 %v550, %v639
    %v641 = vpop.f32.mrf.mxu0
    %642 = vdwg.mxu0
    %643 = vmatprep.subr.mxu0 0.0
    %v644 = vand.u32 %v544, 4294901760
    %v645 = vsub.f32 %v544, %v644
    %v646 = vand.u32 %v645, 4294901760
    %v647 = vsub.f32 %v645, %v646
    %v648 = vand.u32 %v647, 4294901760
    %649 = vmatpush1.msra.mxu0 %v648
    %650 = vmatprep.subr.mxu0 0.0
    %v651 = vand.u32 %v543, 4294901760
    %v652 = vsub.f32 %v543, %v651
    %v653 = vand.u32 %v652, 4294901760
    %v654 = vsub.f32 %v652, %v653
    %v655 = vand.u32 %v654, 4294901760
    %656 = vmatpush1.msra.mxu0 %v655
    %657 = vmatprep.subr.mxu0 0.0
    %v658 = vand.u32 %v542, 4294901760
    %v659 = vsub.f32 %v542, %v658
    %v660 = vand.u32 %v659, 4294901760
    %v661 = vsub.f32 %v659, %v660
    %v662 = vand.u32 %v661, 4294901760
    %663 = vmatpush1.msra.mxu0 %v662
    %664 = vmatprep.subr.mxu0 0.0
    %v665 = vand.u32 %v541, 4294901760
    %v666 = vsub.f32 %v541, %v665
    %v667 = vand.u32 %v666, 4294901760
    %v668 = vsub.f32 %v666, %v667
    %v669 = vand.u32 %v668, 4294901760
    %670 = vmatpush1.msra.mxu0 %v669
    %671 = vmatprep.subr.mxu0 0.0
    %v672 = vand.u32 %v540, 4294901760
    %v673 = vsub.f32 %v540, %v672
    %v674 = vand.u32 %v673, 4294901760
    %v675 = vsub.f32 %v673, %v674
    %v676 = vand.u32 %v675, 4294901760
    %677 = vmatpush1.msra.mxu0 %v676
    %678 = vmatprep.subr.mxu0 0.0
    %v679 = vand.u32 %v539, 4294901760
    %v680 = vsub.f32 %v539, %v679
    %v681 = vand.u32 %v680, 4294901760
    %v682 = vsub.f32 %v680, %v681
    %v683 = vand.u32 %v682, 4294901760
    %684 = vmatpush1.msra.mxu0 %v683
    %685 = vmatprep.subr.mxu0 0.0
    %v686 = vand.u32 %v538, 4294901760
    %v687 = vsub.f32 %v538, %v686
    %v688 = vand.u32 %v687, 4294901760
    %v689 = vsub.f32 %v687, %v688
    %v690 = vand.u32 %v689, 4294901760
    %691 = vmatpush1.msra.mxu0 %v690
    %692 = vmatprep.subr.mxu0 0.0
    %v693 = vand.u32 %v537, 4294901760
    %v694 = vsub.f32 %v537, %v693
    %v695 = vand.u32 %v694, 4294901760
    %v696 = vsub.f32 %v694, %v695
    %v697 = vand.u32 %v696, 4294901760
    %698 = vmatpush1.msra.mxu0 %v697
    %699 = vmatprep.subr.mxu0 0.0
    %v700 = vand.u32 %v536, 4294901760
    %v701 = vsub.f32 %v536, %v700
    %v702 = vand.u32 %v701, 4294901760
    %v703 = vsub.f32 %v701, %v702
    %v704 = vand.u32 %v703, 4294901760
    %705 = vmatpush1.msra.mxu0 %v704
    %706 = vmatprep.subr.mxu0 0.0
    %v707 = vand.u32 %v535, 4294901760
    %v708 = vsub.f32 %v535, %v707
    %v709 = vand.u32 %v708, 4294901760
    %v710 = vsub.f32 %v708, %v709
    %v711 = vand.u32 %v710, 4294901760
    %712 = vmatpush1.msra.mxu0 %v711
    %713 = vmatprep.subr.mxu0 0.0
    %v714 = vand.u32 %v534, 4294901760
    %v715 = vsub.f32 %v534, %v714
    %v716 = vand.u32 %v715, 4294901760
    %v717 = vsub.f32 %v715, %v716
    %v718 = vand.u32 %v717, 4294901760
    %719 = vmatpush1.msra.mxu0 %v718
    %720 = vmatprep.subr.mxu0 0.0
    %v721 = vand.u32 %v533, 4294901760
    %v722 = vsub.f32 %v533, %v721
    %v723 = vand.u32 %v722, 4294901760
    %v724 = vsub.f32 %v722, %v723
    %v725 = vand.u32 %v724, 4294901760
    %726 = vmatpush1.msra.mxu0 %v725
    %727 = vmatprep.subr.mxu0 0.0
    %v728 = vand.u32 %v532, 4294901760
    %v729 = vsub.f32 %v532, %v728
    %v730 = vand.u32 %v729, 4294901760
    %v731 = vsub.f32 %v729, %v730
    %v732 = vand.u32 %v731, 4294901760
    %733 = vmatpush1.msra.mxu0 %v732
    %734 = vmatprep.subr.mxu0 0.0
    %v735 = vand.u32 %v531, 4294901760
    %v736 = vsub.f32 %v531, %v735
    %v737 = vand.u32 %v736, 4294901760
    %v738 = vsub.f32 %v736, %v737
    %v739 = vand.u32 %v738, 4294901760
    %740 = vmatpush1.msra.mxu0 %v739
    %741 = vmatprep.subr.mxu0 0.0
    %v742 = vand.u32 %v530, 4294901760
    %v743 = vsub.f32 %v530, %v742
    %v744 = vand.u32 %v743, 4294901760
    %v745 = vsub.f32 %v743, %v744
    %v746 = vand.u32 %v745, 4294901760
    %747 = vmatpush1.msra.mxu0 %v746
    %748 = vmatprep.subr.mxu0 0.0
    %v749 = vand.u32 %v529, 4294901760
    %v750 = vsub.f32 %v529, %v749
    %v751 = vand.u32 %v750, 4294901760
    %v752 = vsub.f32 %v750, %v751
    %v753 = vand.u32 %v752, 4294901760
    %754 = vmatpush1.msra.mxu0 %v753
    %755 = vmatprep.subr.mxu0 0.0
    %756 = vmatpush2.msra.mxu0 0.0
    %757 = vmatprep.subr.mxu0 0.0
    %758 = vmatpush2.msra.mxu0 0.0
    %759 = vmatprep.subr.mxu0 0.0
    %760 = vmatpush2.msra.mxu0 0.0
    %761 = vmatprep.subr.mxu0 0.0
    %762 = vmatpush2.msra.mxu0 0.0
    %763 = vmatprep.subr.mxu0 0.0
    %764 = vmatpush2.msra.mxu0 0.0
    %765 = vmatprep.subr.mxu0 0.0
    %766 = vmatpush2.msra.mxu0 0.0
    %767 = vmatprep.subr.mxu0 0.0
    %768 = vmatpush2.msra.mxu0 0.0
    %769 = vmatprep.subr.mxu0 0.0
    %770 = vmatpush2.msra.mxu0 0.0
    %771 = vmatprep.subr.mxu0 0.0
    %772 = vmatpush2.msra.mxu0 0.0
    %773 = vmatprep.subr.mxu0 0.0
    %774 = vmatpush2.msra.mxu0 0.0
    %775 = vmatprep.subr.mxu0 0.0
    %776 = vmatpush2.msra.mxu0 0.0
    %777 = vmatprep.subr.mxu0 0.0
    %778 = vmatpush2.msra.mxu0 0.0
    %779 = vmatprep.subr.mxu0 0.0
    %780 = vmatpush2.msra.mxu0 0.0
    %781 = vmatprep.subr.mxu0 0.0
    %782 = vmatpush2.msra.mxu0 0.0
    %783 = vmatprep.subr.mxu0 0.0
    %784 = vmatpush2.msra.mxu0 0.0
    %785 = vmatprep.subr.mxu0 0.0
    %786 = vmatpush2.msra.mxu0 0.0
    %787 = vmatprep.mubr.f32.mxu0 0.0
    %v788 = vand.u32 %v528, 4294901760
    %789 = vmatmul.mubr.f32.gmra.mxu0 %v788
    %v790 = vpop.f32.mrf.mxu0
    %v791 = vadd.f32 %v640, %v790
    %v792 = vpop.f32.mrf.mxu0
    %793 = vdwg.mxu0
    %794 = vmatprep.subr.mxu0 0.0
    %v795 = vand.u32 %v544, 4294901760
    %v796 = vsub.f32 %v544, %v795
    %797 = vmatpush1.msra.mxu0 %v796
    %798 = vmatprep.subr.mxu0 0.0
    %v799 = vand.u32 %v543, 4294901760
    %v800 = vsub.f32 %v543, %v799
    %801 = vmatpush1.msra.mxu0 %v800
    %802 = vmatprep.subr.mxu0 0.0
    %v803 = vand.u32 %v542, 4294901760
    %v804 = vsub.f32 %v542, %v803
    %805 = vmatpush1.msra.mxu0 %v804
    %806 = vmatprep.subr.mxu0 0.0
    %v807 = vand.u32 %v541, 4294901760
    %v808 = vsub.f32 %v541, %v807
    %809 = vmatpush1.msra.mxu0 %v808
    %810 = vmatprep.subr.mxu0 0.0
    %v811 = vand.u32 %v540, 4294901760
    %v812 = vsub.f32 %v540, %v811
    %813 = vmatpush1.msra.mxu0 %v812
    %814 = vmatprep.subr.mxu0 0.0
    %v815 = vand.u32 %v539, 4294901760
    %v816 = vsub.f32 %v539, %v815
    %817 = vmatpush1.msra.mxu0 %v816
    %818 = vmatprep.subr.mxu0 0.0
    %v819 = vand.u32 %v538, 4294901760
    %v820 = vsub.f32 %v538, %v819
    %821 = vmatpush1.msra.mxu0 %v820
    %822 = vmatprep.subr.mxu0 0.0
    %v823 = vand.u32 %v537, 4294901760
    %v824 = vsub.f32 %v537, %v823
    %825 = vmatpush1.msra.mxu0 %v824
    %826 = vmatprep.subr.mxu0 0.0
    %v827 = vand.u32 %v536, 4294901760
    %v828 = vsub.f32 %v536, %v827
    %829 = vmatpush1.msra.mxu0 %v828
    %830 = vmatprep.subr.mxu0 0.0
    %v831 = vand.u32 %v535, 4294901760
    %v832 = vsub.f32 %v535, %v831
    %833 = vmatpush1.msra.mxu0 %v832
    %834 = vmatprep.subr.mxu0 0.0
    %v835 = vand.u32 %v534, 4294901760
    %v836 = vsub.f32 %v534, %v835
    %837 = vmatpush1.msra.mxu0 %v836
    %838 = vmatprep.subr.mxu0 0.0
    %v839 = vand.u32 %v533, 4294901760
    %v840 = vsub.f32 %v533, %v839
    %841 = vmatpush1.msra.mxu0 %v840
    %842 = vmatprep.subr.mxu0 0.0
    %v843 = vand.u32 %v532, 4294901760
    %v844 = vsub.f32 %v532, %v843
    %845 = vmatpush1.msra.mxu0 %v844
    %846 = vmatprep.subr.mxu0 0.0
    %v847 = vand.u32 %v531, 4294901760
    %v848 = vsub.f32 %v531, %v847
    %849 = vmatpush1.msra.mxu0 %v848
    %850 = vmatprep.subr.mxu0 0.0
    %v851 = vand.u32 %v530, 4294901760
    %v852 = vsub.f32 %v530, %v851
    %853 = vmatpush1.msra.mxu0 %v852
    %854 = vmatprep.subr.mxu0 0.0
    %v855 = vand.u32 %v529, 4294901760
    %v856 = vsub.f32 %v529, %v855
    %857 = vmatpush1.msra.mxu0 %v856
    %858 = vmatprep.subr.mxu0 0.0
    %859 = vmatpush2.msra.mxu0 0.0
    %860 = vmatprep.subr.mxu0 0.0
    %861 = vmatpush2.msra.mxu0 0.0
    %862 = vmatprep.subr.mxu0 0.0
    %863 = vmatpush2.msra.mxu0 0.0
    %864 = vmatprep.subr.mxu0 0.0
    %865 = vmatpush2.msra.mxu0 0.0
    %866 = vmatprep.subr.mxu0 0.0
    %867 = vmatpush2.msra.mxu0 0.0
    %868 = vmatprep.subr.mxu0 0.0
    %869 = vmatpush2.msra.mxu0 0.0
    %870 = vmatprep.subr.mxu0 0.0
    %871 = vmatpush2.msra.mxu0 0.0
    %872 = vmatprep.subr.mxu0 0.0
    %873 = vmatpush2.msra.mxu0 0.0
    %874 = vmatprep.subr.mxu0 0.0
    %875 = vmatpush2.msra.mxu0 0.0
    %876 = vmatprep.subr.mxu0 0.0
    %877 = vmatpush2.msra.mxu0 0.0
    %878 = vmatprep.subr.mxu0 0.0
    %879 = vmatpush2.msra.mxu0 0.0
    %880 = vmatprep.subr.mxu0 0.0
    %881 = vmatpush2.msra.mxu0 0.0
    %882 = vmatprep.subr.mxu0 0.0
    %883 = vmatpush2.msra.mxu0 0.0
    %884 = vmatprep.subr.mxu0 0.0
    %885 = vmatpush2.msra.mxu0 0.0
    %886 = vmatprep.subr.mxu0 0.0
    %887 = vmatpush2.msra.mxu0 0.0
    %888 = vmatprep.subr.mxu0 0.0
    %889 = vmatpush2.msra.mxu0 0.0
    %890 = vmatprep.mubr.f32.mxu0 0.0
    %v891 = vand.u32 %v528, 4294901760
    %v892 = vsub.f32 %v528, %v891
    %893 = vmatmul.mubr.f32.gmra.mxu0 %v892
    %v894 = vpop.f32.mrf.mxu0
    %v895 = vadd.f32 %v791, %v894
    %v896 = vpop.f32.mrf.mxu0
    %897 = vdwg.mxu0
    %898 = vmatprep.subr.mxu0 0.0
    %v899 = vand.u32 %v544, 4294901760
    %900 = vmatpush1.msra.mxu0 %v899
    %901 = vmatprep.subr.mxu0 0.0
    %v902 = vand.u32 %v543, 4294901760
    %903 = vmatpush1.msra.mxu0 %v902
    %904 = vmatprep.subr.mxu0 0.0
    %v905 = vand.u32 %v542, 4294901760
    %906 = vmatpush1.msra.mxu0 %v905
    %907 = vmatprep.subr.mxu0 0.0
    %v908 = vand.u32 %v541, 4294901760
    %909 = vmatpush1.msra.mxu0 %v908
    %910 = vmatprep.subr.mxu0 0.0
    %v911 = vand.u32 %v540, 4294901760
    %912 = vmatpush1.msra.mxu0 %v911
    %913 = vmatprep.subr.mxu0 0.0
    %v914 = vand.u32 %v539, 4294901760
    %915 = vmatpush1.msra.mxu0 %v914
    %916 = vmatprep.subr.mxu0 0.0
    %v917 = vand.u32 %v538, 4294901760
    %918 = vmatpush1.msra.mxu0 %v917
    %919 = vmatprep.subr.mxu0 0.0
    %v920 = vand.u32 %v537, 4294901760
    %921 = vmatpush1.msra.mxu0 %v920
    %922 = vmatprep.subr.mxu0 0.0
    %v923 = vand.u32 %v536, 4294901760
    %924 = vmatpush1.msra.mxu0 %v923
    %925 = vmatprep.subr.mxu0 0.0
    %v926 = vand.u32 %v535, 4294901760
    %927 = vmatpush1.msra.mxu0 %v926
    %928 = vmatprep.subr.mxu0 0.0
    %v929 = vand.u32 %v534, 4294901760
    %930 = vmatpush1.msra.mxu0 %v929
    %931 = vmatprep.subr.mxu0 0.0
    %v932 = vand.u32 %v533, 4294901760
    %933 = vmatpush1.msra.mxu0 %v932
    %934 = vmatprep.subr.mxu0 0.0
    %v935 = vand.u32 %v532, 4294901760
    %936 = vmatpush1.msra.mxu0 %v935
    %937 = vmatprep.subr.mxu0 0.0
    %v938 = vand.u32 %v531, 4294901760
    %939 = vmatpush1.msra.mxu0 %v938
    %940 = vmatprep.subr.mxu0 0.0
    %v941 = vand.u32 %v530, 4294901760
    %942 = vmatpush1.msra.mxu0 %v941
    %943 = vmatprep.subr.mxu0 0.0
    %v944 = vand.u32 %v529, 4294901760
    %945 = vmatpush1.msra.mxu0 %v944
    %946 = vmatprep.subr.mxu0 0.0
    %947 = vmatpush2.msra.mxu0 0.0
    %948 = vmatprep.subr.mxu0 0.0
    %949 = vmatpush2.msra.mxu0 0.0
    %950 = vmatprep.subr.mxu0 0.0
    %951 = vmatpush2.msra.mxu0 0.0
    %952 = vmatprep.subr.mxu0 0.0
    %953 = vmatpush2.msra.mxu0 0.0
    %954 = vmatprep.subr.mxu0 0.0
    %955 = vmatpush2.msra.mxu0 0.0
    %956 = vmatprep.subr.mxu0 0.0
    %957 = vmatpush2.msra.mxu0 0.0
    %958 = vmatprep.subr.mxu0 0.0
    %959 = vmatpush2.msra.mxu0 0.0
    %960 = vmatprep.subr.mxu0 0.0
    %961 = vmatpush2.msra.mxu0 0.0
    %962 = vmatprep.subr.mxu0 0.0
    %963 = vmatpush2.msra.mxu0 0.0
    %964 = vmatprep.subr.mxu0 0.0
    %965 = vmatpush2.msra.mxu0 0.0
    %966 = vmatprep.subr.mxu0 0.0
    %967 = vmatpush2.msra.mxu0 0.0
    %968 = vmatprep.subr.mxu0 0.0
    %969 = vmatpush2.msra.mxu0 0.0
    %970 = vmatprep.subr.mxu0 0.0
    %971 = vmatpush2.msra.mxu0 0.0
    %972 = vmatprep.subr.mxu0 0.0
    %973 = vmatpush2.msra.mxu0 0.0
    %974 = vmatprep.subr.mxu0 0.0
    %975 = vmatpush2.msra.mxu0 0.0
    %976 = vmatprep.subr.mxu0 0.0
    %977 = vmatpush2.msra.mxu0 0.0
    %978 = vmatprep.mubr.f32.mxu0 0.0
    %v979 = vand.u32 %v528, 4294901760
    %v980 = vsub.f32 %v528, %v979
    %v981 = vand.u32 %v980, 4294901760
    %982 = vmatmul.mubr.f32.gmra.mxu0 %v981
    %v983 = vpop.f32.mrf.mxu0
    %v984 = vadd.f32 %v895, %v983
    %v985 = vpop.f32.mrf.mxu0
    %986 = vdwg.mxu0
    %987 = vmatprep.subr.mxu0 0.0
    %v988 = vand.u32 %v544, 4294901760
    %v989 = vsub.f32 %v544, %v988
    %v990 = vand.u32 %v989, 4294901760
    %991 = vmatpush1.msra.mxu0 %v990
    %992 = vmatprep.subr.mxu0 0.0
    %v993 = vand.u32 %v543, 4294901760
    %v994 = vsub.f32 %v543, %v993
    %v995 = vand.u32 %v994, 4294901760
    %996 = vmatpush1.msra.mxu0 %v995
    %997 = vmatprep.subr.mxu0 0.0
    %v998 = vand.u32 %v542, 4294901760
    %v999 = vsub.f32 %v542, %v998
    %v1000 = vand.u32 %v999, 4294901760
    %1001 = vmatpush1.msra.mxu0 %v1000
    %1002 = vmatprep.subr.mxu0 0.0
    %v1003 = vand.u32 %v541, 4294901760
    %v1004 = vsub.f32 %v541, %v1003
    %v1005 = vand.u32 %v1004, 4294901760
    %1006 = vmatpush1.msra.mxu0 %v1005
    %1007 = vmatprep.subr.mxu0 0.0
    %v1008 = vand.u32 %v540, 4294901760
    %v1009 = vsub.f32 %v540, %v1008
    %v1010 = vand.u32 %v1009, 4294901760
    %1011 = vmatpush1.msra.mxu0 %v1010
    %1012 = vmatprep.subr.mxu0 0.0
    %v1013 = vand.u32 %v539, 4294901760
    %v1014 = vsub.f32 %v539, %v1013
    %v1015 = vand.u32 %v1014, 4294901760
    %1016 = vmatpush1.msra.mxu0 %v1015
    %1017 = vmatprep.subr.mxu0 0.0
    %v1018 = vand.u32 %v538, 4294901760
    %v1019 = vsub.f32 %v538, %v1018
    %v1020 = vand.u32 %v1019, 4294901760
    %1021 = vmatpush1.msra.mxu0 %v1020
    %1022 = vmatprep.subr.mxu0 0.0
    %v1023 = vand.u32 %v537, 4294901760
    %v1024 = vsub.f32 %v537, %v1023
    %v1025 = vand.u32 %v1024, 4294901760
    %1026 = vmatpush1.msra.mxu0 %v1025
    %1027 = vmatprep.subr.mxu0 0.0
    %v1028 = vand.u32 %v536, 4294901760
    %v1029 = vsub.f32 %v536, %v1028
    %v1030 = vand.u32 %v1029, 4294901760
    %1031 = vmatpush1.msra.mxu0 %v1030
    %1032 = vmatprep.subr.mxu0 0.0
    %v1033 = vand.u32 %v535, 4294901760
    %v1034 = vsub.f32 %v535, %v1033
    %v1035 = vand.u32 %v1034, 4294901760
    %1036 = vmatpush1.msra.mxu0 %v1035
    %1037 = vmatprep.subr.mxu0 0.0
    %v1038 = vand.u32 %v534, 4294901760
    %v1039 = vsub.f32 %v534, %v1038
    %v1040 = vand.u32 %v1039, 4294901760
    %1041 = vmatpush1.msra.mxu0 %v1040
    %1042 = vmatprep.subr.mxu0 0.0
    %v1043 = vand.u32 %v533, 4294901760
    %v1044 = vsub.f32 %v533, %v1043
    %v1045 = vand.u32 %v1044, 4294901760
    %1046 = vmatpush1.msra.mxu0 %v1045
    %1047 = vmatprep.subr.mxu0 0.0
    %v1048 = vand.u32 %v532, 4294901760
    %v1049 = vsub.f32 %v532, %v1048
    %v1050 = vand.u32 %v1049, 4294901760
    %1051 = vmatpush1.msra.mxu0 %v1050
    %1052 = vmatprep.subr.mxu0 0.0
    %v1053 = vand.u32 %v531, 4294901760
    %v1054 = vsub.f32 %v531, %v1053
    %v1055 = vand.u32 %v1054, 4294901760
    %1056 = vmatpush1.msra.mxu0 %v1055
    %1057 = vmatprep.subr.mxu0 0.0
    %v1058 = vand.u32 %v530, 4294901760
    %v1059 = vsub.f32 %v530, %v1058
    %v1060 = vand.u32 %v1059, 4294901760
    %1061 = vmatpush1.msra.mxu0 %v1060
    %1062 = vmatprep.subr.mxu0 0.0
    %v1063 = vand.u32 %v529, 4294901760
    %v1064 = vsub.f32 %v529, %v1063
    %v1065 = vand.u32 %v1064, 4294901760
    %1066 = vmatpush1.msra.mxu0 %v1065
    %1067 = vmatprep.subr.mxu0 0.0
    %1068 = vmatpush2.msra.mxu0 0.0
    %1069 = vmatprep.subr.mxu0 0.0
    %1070 = vmatpush2.msra.mxu0 0.0
    %1071 = vmatprep.subr.mxu0 0.0
    %1072 = vmatpush2.msra.mxu0 0.0
    %1073 = vmatprep.subr.mxu0 0.0
    %1074 = vmatpush2.msra.mxu0 0.0
    %1075 = vmatprep.subr.mxu0 0.0
    %1076 = vmatpush2.msra.mxu0 0.0
    %1077 = vmatprep.subr.mxu0 0.0
    %1078 = vmatpush2.msra.mxu0 0.0
    %1079 = vmatprep.subr.mxu0 0.0
    %1080 = vmatpush2.msra.mxu0 0.0
    %1081 = vmatprep.subr.mxu0 0.0
    %1082 = vmatpush2.msra.mxu0 0.0
    %1083 = vmatprep.subr.mxu0 0.0
    %1084 = vmatpush2.msra.mxu0 0.0
    %1085 = vmatprep.subr.mxu0 0.0
    %1086 = vmatpush2.msra.mxu0 0.0
    %1087 = vmatprep.subr.mxu0 0.0
    %1088 = vmatpush2.msra.mxu0 0.0
    %1089 = vmatprep.subr.mxu0 0.0
    %1090 = vmatpush2.msra.mxu0 0.0
    %1091 = vmatprep.subr.mxu0 0.0
    %1092 = vmatpush2.msra.mxu0 0.0
    %1093 = vmatprep.subr.mxu0 0.0
    %1094 = vmatpush2.msra.mxu0 0.0
    %1095 = vmatprep.subr.mxu0 0.0
    %1096 = vmatpush2.msra.mxu0 0.0
    %1097 = vmatprep.subr.mxu0 0.0
    %1098 = vmatpush2.msra.mxu0 0.0
    %1099 = vmatprep.mubr.f32.mxu0 0.0
    %v1100 = vand.u32 %v528, 4294901760
    %1101 = vmatmul.mubr.f32.gmra.mxu0 %v1100
    %v1102 = vpop.f32.mrf.mxu0
    %v1103 = vadd.f32 %v984, %v1102
    %v1104 = vpop.f32.mrf.mxu0
    %1105 = vdwg.mxu0
    %1106 = vmatprep.subr.mxu0 0.0
    %v1107 = vand.u32 %v544, 4294901760
    %1108 = vmatpush1.msra.mxu0 %v1107
    %1109 = vmatprep.subr.mxu0 0.0
    %v1110 = vand.u32 %v543, 4294901760
    %1111 = vmatpush1.msra.mxu0 %v1110
    %1112 = vmatprep.subr.mxu0 0.0
    %v1113 = vand.u32 %v542, 4294901760
    %1114 = vmatpush1.msra.mxu0 %v1113
    %1115 = vmatprep.subr.mxu0 0.0
    %v1116 = vand.u32 %v541, 4294901760
    %1117 = vmatpush1.msra.mxu0 %v1116
    %1118 = vmatprep.subr.mxu0 0.0
    %v1119 = vand.u32 %v540, 4294901760
    %1120 = vmatpush1.msra.mxu0 %v1119
    %1121 = vmatprep.subr.mxu0 0.0
    %v1122 = vand.u32 %v539, 4294901760
    %1123 = vmatpush1.msra.mxu0 %v1122
    %1124 = vmatprep.subr.mxu0 0.0
    %v1125 = vand.u32 %v538, 4294901760
    %1126 = vmatpush1.msra.mxu0 %v1125
    %1127 = vmatprep.subr.mxu0 0.0
    %v1128 = vand.u32 %v537, 4294901760
    %1129 = vmatpush1.msra.mxu0 %v1128
    %1130 = vmatprep.subr.mxu0 0.0
    %v1131 = vand.u32 %v536, 4294901760
    %1132 = vmatpush1.msra.mxu0 %v1131
    %1133 = vmatprep.subr.mxu0 0.0
    %v1134 = vand.u32 %v535, 4294901760
    %1135 = vmatpush1.msra.mxu0 %v1134
    %1136 = vmatprep.subr.mxu0 0.0
    %v1137 = vand.u32 %v534, 4294901760
    %1138 = vmatpush1.msra.mxu0 %v1137
    %1139 = vmatprep.subr.mxu0 0.0
    %v1140 = vand.u32 %v533, 4294901760
    %1141 = vmatpush1.msra.mxu0 %v1140
    %1142 = vmatprep.subr.mxu0 0.0
    %v1143 = vand.u32 %v532, 4294901760
    %1144 = vmatpush1.msra.mxu0 %v1143
    %1145 = vmatprep.subr.mxu0 0.0
    %v1146 = vand.u32 %v531, 4294901760
    %1147 = vmatpush1.msra.mxu0 %v1146
    %1148 = vmatprep.subr.mxu0 0.0
    %v1149 = vand.u32 %v530, 4294901760
    %1150 = vmatpush1.msra.mxu0 %v1149
    %1151 = vmatprep.subr.mxu0 0.0
    %v1152 = vand.u32 %v529, 4294901760
    %1153 = vmatpush1.msra.mxu0 %v1152
    %1154 = vmatprep.subr.mxu0 0.0
    %1155 = vmatpush2.msra.mxu0 0.0
    %1156 = vmatprep.subr.mxu0 0.0
    %1157 = vmatpush2.msra.mxu0 0.0
    %1158 = vmatprep.subr.mxu0 0.0
    %1159 = vmatpush2.msra.mxu0 0.0
    %1160 = vmatprep.subr.mxu0 0.0
    %1161 = vmatpush2.msra.mxu0 0.0
    %1162 = vmatprep.subr.mxu0 0.0
    %1163 = vmatpush2.msra.mxu0 0.0
    %1164 = vmatprep.subr.mxu0 0.0
    %1165 = vmatpush2.msra.mxu0 0.0
    %1166 = vmatprep.subr.mxu0 0.0
    %1167 = vmatpush2.msra.mxu0 0.0
    %1168 = vmatprep.subr.mxu0 0.0
    %1169 = vmatpush2.msra.mxu0 0.0
    %1170 = vmatprep.subr.mxu0 0.0
    %1171 = vmatpush2.msra.mxu0 0.0
    %1172 = vmatprep.subr.mxu0 0.0
    %1173 = vmatpush2.msra.mxu0 0.0
    %1174 = vmatprep.subr.mxu0 0.0
    %1175 = vmatpush2.msra.mxu0 0.0
    %1176 = vmatprep.subr.mxu0 0.0
    %1177 = vmatpush2.msra.mxu0 0.0
    %1178 = vmatprep.subr.mxu0 0.0
    %1179 = vmatpush2.msra.mxu0 0.0
    %1180 = vmatprep.subr.mxu0 0.0
    %1181 = vmatpush2.msra.mxu0 0.0
    %1182 = vmatprep.subr.mxu0 0.0
    %1183 = vmatpush2.msra.mxu0 0.0
    %1184 = vmatprep.subr.mxu0 0.0
    %1185 = vmatpush2.msra.mxu0 0.0
    %1186 = vmatprep.mubr.f32.mxu0 0.0
    %v1187 = vand.u32 %v528, 4294901760
    %1188 = vmatmul.mubr.f32.gmra.mxu0 %v1187
    %v1189 = vpop.f32.mrf.mxu0
    %v1190 = vadd.f32 %v1103, %v1189
    %v1191 = vpop.f32.mrf.mxu0
    %1192 = vdwg.mxu0
    %v1193 = vmax.f32 %v1190, 0.0
    %v1194 = vld [vmem:[%s5] sm:$0xff]
    %v1195 = vld [vmem:[%s5 + $0x8] sm:$0xff]
    %v1196 = vld [vmem:[%s5 + $0x10] sm:$0xff]
    %v1197 = vld [vmem:[%s5 + $0x18] sm:$0xff]
    %v1198 = vld [vmem:[%s5 + $0x20] sm:$0xff]
    %v1199 = vld [vmem:[%s5 + $0x28] sm:$0xff]
    %v1200 = vld [vmem:[%s5 + $0x30] sm:$0xff]
    %v1201 = vld [vmem:[%s5 + $0x38] sm:$0xff]
    %v1202 = vld [vmem:[%s6] sm:$0x1]
    %v1204 = vlaneseq
    %v1205 = vshrl.u32 %v1204, 7
    %v1206 = vsub.s32 0, %v1205
    %v1207 = vrot.slane %v1202, %v1206
    %vm1209 = vcmask 523264
    %v1211 = vsel %vm1209, %v1193, 0
    %1213 = vmatprep.subr.mxu0 0.0
    %1214 = vmatpush1.msra.mxu0 0.0
    %1215 = vmatprep.subr.mxu0 0.0
    %1216 = vmatpush1.msra.mxu0 0.0
    %1217 = vmatprep.subr.mxu0 0.0
    %1218 = vmatpush1.msra.mxu0 0.0
    %1219 = vmatprep.subr.mxu0 0.0
    %1220 = vmatpush1.msra.mxu0 0.0
    %1221 = vmatprep.subr.mxu0 0.0
    %1222 = vmatpush1.msra.mxu0 0.0
    %1223 = vmatprep.subr.mxu0 0.0
    %1224 = vmatpush1.msra.mxu0 0.0
    %1225 = vmatprep.subr.mxu0 0.0
    %1226 = vmatpush1.msra.mxu0 0.0
    %1227 = vmatprep.subr.mxu0 0.0
    %1228 = vmatpush1.msra.mxu0 0.0
    %1229 = vmatprep.subr.mxu0 0.0
    %v1230 = vand.u32 %v1201, 4294901760
    %1231 = vmatpush1.msra.mxu0 %v1230
    %1232 = vmatprep.subr.mxu0 0.0
    %v1233 = vand.u32 %v1200, 4294901760
    %1234 = vmatpush1.msra.mxu0 %v1233
    %1235 = vmatprep.subr.mxu0 0.0
    %v1236 = vand.u32 %v1199, 4294901760
    %1237 = vmatpush1.msra.mxu0 %v1236
    %1238 = vmatprep.subr.mxu0 0.0
    %v1239 = vand.u32 %v1198, 4294901760
    %1240 = vmatpush1.msra.mxu0 %v1239
    %1241 = vmatprep.subr.mxu0 0.0
    %v1242 = vand.u32 %v1197, 4294901760
    %1243 = vmatpush1.msra.mxu0 %v1242
    %1244 = vmatprep.subr.mxu0 0.0
    %v1245 = vand.u32 %v1196, 4294901760
    %1246 = vmatpush1.msra.mxu0 %v1245
    %1247 = vmatprep.subr.mxu0 0.0
    %v1248 = vand.u32 %v1195, 4294901760
    %1249 = vmatpush1.msra.mxu0 %v1248
    %1250 = vmatprep.subr.mxu0 0.0
    %v1251 = vand.u32 %v1194, 4294901760
    %1252 = vmatpush1.msra.mxu0 %v1251
    %1253 = vmatprep.subr.mxu0 0.0
    %1254 = vmatpush2.msra.mxu0 0.0
    %1255 = vmatprep.subr.mxu0 0.0
    %1256 = vmatpush2.msra.mxu0 0.0
    %1257 = vmatprep.subr.mxu0 0.0
    %1258 = vmatpush2.msra.mxu0 0.0
    %1259 = vmatprep.subr.mxu0 0.0
    %1260 = vmatpush2.msra.mxu0 0.0
    %1261 = vmatprep.subr.mxu0 0.0
    %1262 = vmatpush2.msra.mxu0 0.0
    %1263 = vmatprep.subr.mxu0 0.0
    %1264 = vmatpush2.msra.mxu0 0.0
    %1265 = vmatprep.subr.mxu0 0.0
    %1266 = vmatpush2.msra.mxu0 0.0
    %1267 = vmatprep.subr.mxu0 0.0
    %1268 = vmatpush2.msra.mxu0 0.0
    %1269 = vmatprep.subr.mxu0 0.0
    %1270 = vmatpush2.msra.mxu0 0.0
    %1271 = vmatprep.subr.mxu0 0.0
    %1272 = vmatpush2.msra.mxu0 0.0
    %1273 = vmatprep.subr.mxu0 0.0
    %1274 = vmatpush2.msra.mxu0 0.0
    %1275 = vmatprep.subr.mxu0 0.0
    %1276 = vmatpush2.msra.mxu0 0.0
    %1277 = vmatprep.subr.mxu0 0.0
    %1278 = vmatpush2.msra.mxu0 0.0
    %1279 = vmatprep.subr.mxu0 0.0
    %1280 = vmatpush2.msra.mxu0 0.0
    %1281 = vmatprep.subr.mxu0 0.0
    %1282 = vmatpush2.msra.mxu0 0.0
    %1283 = vmatprep.subr.mxu0 0.0
    %1284 = vmatpush2.msra.mxu0 0.0
    %1285 = vmatprep.mubr.f32.mxu0 0.0
    %v1286 = vand.u32 %v1211, 4294901760
    %v1287 = vsub.f32 %v1211, %v1286
    %v1288 = vand.u32 %v1287, 4294901760
    %v1289 = vsub.f32 %v1287, %v1288
    %v1290 = vand.u32 %v1289, 4294901760
    %1291 = vmatmul.mubr.f32.gmra.mxu0 %v1290
    %v1292 = vpop.f32.mrf.mxu0
    %v1293 = vadd.f32 %v1207, %v1292
    %v1294 = vpop.f32.mrf.mxu0
    %1295 = vdwg.mxu0
    %1296 = vmatprep.subr.mxu0 0.0
    %1297 = vmatpush1.msra.mxu0 0.0
    %1298 = vmatprep.subr.mxu0 0.0
    %1299 = vmatpush1.msra.mxu0 0.0
    %1300 = vmatprep.subr.mxu0 0.0
    %1301 = vmatpush1.msra.mxu0 0.0
    %1302 = vmatprep.subr.mxu0 0.0
    %1303 = vmatpush1.msra.mxu0 0.0
    %1304 = vmatprep.subr.mxu0 0.0
    %1305 = vmatpush1.msra.mxu0 0.0
    %1306 = vmatprep.subr.mxu0 0.0
    %1307 = vmatpush1.msra.mxu0 0.0
    %1308 = vmatprep.subr.mxu0 0.0
    %1309 = vmatpush1.msra.mxu0 0.0
    %1310 = vmatprep.subr.mxu0 0.0
    %1311 = vmatpush1.msra.mxu0 0.0
    %1312 = vmatprep.subr.mxu0 0.0
    %v1313 = vand.u32 %v1201, 4294901760
    %v1314 = vsub.f32 %v1201, %v1313
    %v1315 = vand.u32 %v1314, 4294901760
    %v1316 = vsub.f32 %v1314, %v1315
    %v1317 = vand.u32 %v1316, 4294901760
    %1318 = vmatpush1.msra.mxu0 %v1317
    %1319 = vmatprep.subr.mxu0 0.0
    %v1320 = vand.u32 %v1200, 4294901760
    %v1321 = vsub.f32 %v1200, %v1320
    %v1322 = vand.u32 %v1321, 4294901760
    %v1323 = vsub.f32 %v1321, %v1322
    %v1324 = vand.u32 %v1323, 4294901760
    %1325 = vmatpush1.msra.mxu0 %v1324
    %1326 = vmatprep.subr.mxu0 0.0
    %v1327 = vand.u32 %v1199, 4294901760
    %v1328 = vsub.f32 %v1199, %v1327
    %v1329 = vand.u32 %v1328, 4294901760
    %v1330 = vsub.f32 %v1328, %v1329
    %v1331 = vand.u32 %v1330, 4294901760
    %1332 = vmatpush1.msra.mxu0 %v1331
    %1333 = vmatprep.subr.mxu0 0.0
    %v1334 = vand.u32 %v1198, 4294901760
    %v1335 = vsub.f32 %v1198, %v1334
    %v1336 = vand.u32 %v1335, 4294901760
    %v1337 = vsub.f32 %v1335, %v1336
    %v1338 = vand.u32 %v1337, 4294901760
    %1339 = vmatpush1.msra.mxu0 %v1338
    %1340 = vmatprep.subr.mxu0 0.0
    %v1341 = vand.u32 %v1197, 4294901760
    %v1342 = vsub.f32 %v1197, %v1341
    %v1343 = vand.u32 %v1342, 4294901760
    %v1344 = vsub.f32 %v1342, %v1343
    %v1345 = vand.u32 %v1344, 4294901760
    %1346 = vmatpush1.msra.mxu0 %v1345
    %1347 = vmatprep.subr.mxu0 0.0
    %v1348 = vand.u32 %v1196, 4294901760
    %v1349 = vsub.f32 %v1196, %v1348
    %v1350 = vand.u32 %v1349, 4294901760
    %v1351 = vsub.f32 %v1349, %v1350
    %v1352 = vand.u32 %v1351, 4294901760
    %1353 = vmatpush1.msra.mxu0 %v1352
    %1354 = vmatprep.subr.mxu0 0.0
    %v1355 = vand.u32 %v1195, 4294901760
    %v1356 = vsub.f32 %v1195, %v1355
    %v1357 = vand.u32 %v1356, 4294901760
    %v1358 = vsub.f32 %v1356, %v1357
    %v1359 = vand.u32 %v1358, 4294901760
    %1360 = vmatpush1.msra.mxu0 %v1359
    %1361 = vmatprep.subr.mxu0 0.0
    %v1362 = vand.u32 %v1194, 4294901760
    %v1363 = vsub.f32 %v1194, %v1362
    %v1364 = vand.u32 %v1363, 4294901760
    %v1365 = vsub.f32 %v1363, %v1364
    %v1366 = vand.u32 %v1365, 4294901760
    %1367 = vmatpush1.msra.mxu0 %v1366
    %1368 = vmatprep.subr.mxu0 0.0
    %1369 = vmatpush2.msra.mxu0 0.0
    %1370 = vmatprep.subr.mxu0 0.0
    %1371 = vmatpush2.msra.mxu0 0.0
    %1372 = vmatprep.subr.mxu0 0.0
    %1373 = vmatpush2.msra.mxu0 0.0
    %1374 = vmatprep.subr.mxu0 0.0
    %1375 = vmatpush2.msra.mxu0 0.0
    %1376 = vmatprep.subr.mxu0 0.0
    %1377 = vmatpush2.msra.mxu0 0.0
    %1378 = vmatprep.subr.mxu0 0.0
    %1379 = vmatpush2.msra.mxu0 0.0
    %1380 = vmatprep.subr.mxu0 0.0
    %1381 = vmatpush2.msra.mxu0 0.0
    %1382 = vmatprep.subr.mxu0 0.0
    %1383 = vmatpush2.msra.mxu0 0.0
    %1384 = vmatprep.subr.mxu0 0.0
    %1385 = vmatpush2.msra.mxu0 0.0
    %1386 = vmatprep.subr.mxu0 0.0
    %1387 = vmatpush2.msra.mxu0 0.0
    %1388 = vmatprep.subr.mxu0 0.0
    %1389 = vmatpush2.msra.mxu0 0.0
    %1390 = vmatprep.subr.mxu0 0.0
    %1391 = vmatpush2.msra.mxu0 0.0
    %1392 = vmatprep.subr.mxu0 0.0
    %1393 = vmatpush2.msra.mxu0 0.0
    %1394 = vmatprep.subr.mxu0 0.0
    %1395 = vmatpush2.msra.mxu0 0.0
    %1396 = vmatprep.subr.mxu0 0.0
    %1397 = vmatpush2.msra.mxu0 0.0
    %1398 = vmatprep.subr.mxu0 0.0
    %1399 = vmatpush2.msra.mxu0 0.0
    %1400 = vmatprep.mubr.f32.mxu0 0.0
    %v1401 = vand.u32 %v1211, 4294901760
    %1402 = vmatmul.mubr.f32.gmra.mxu0 %v1401
    %v1403 = vpop.f32.mrf.mxu0
    %v1404 = vadd.f32 %v1293, %v1403
    %v1405 = vpop.f32.mrf.mxu0
    %1406 = vdwg.mxu0
    %1407 = vmatprep.subr.mxu0 0.0
    %1408 = vmatpush1.msra.mxu0 0.0
    %1409 = vmatprep.subr.mxu0 0.0
    %1410 = vmatpush1.msra.mxu0 0.0
    %1411 = vmatprep.subr.mxu0 0.0
    %1412 = vmatpush1.msra.mxu0 0.0
    %1413 = vmatprep.subr.mxu0 0.0
    %1414 = vmatpush1.msra.mxu0 0.0
    %1415 = vmatprep.subr.mxu0 0.0
    %1416 = vmatpush1.msra.mxu0 0.0
    %1417 = vmatprep.subr.mxu0 0.0
    %1418 = vmatpush1.msra.mxu0 0.0
    %1419 = vmatprep.subr.mxu0 0.0
    %1420 = vmatpush1.msra.mxu0 0.0
    %1421 = vmatprep.subr.mxu0 0.0
    %1422 = vmatpush1.msra.mxu0 0.0
    %1423 = vmatprep.subr.mxu0 0.0
    %v1424 = vand.u32 %v1201, 4294901760
    %v1425 = vsub.f32 %v1201, %v1424
    %1426 = vmatpush1.msra.mxu0 %v1425
    %1427 = vmatprep.subr.mxu0 0.0
    %v1428 = vand.u32 %v1200, 4294901760
    %v1429 = vsub.f32 %v1200, %v1428
    %1430 = vmatpush1.msra.mxu0 %v1429
    %1431 = vmatprep.subr.mxu0 0.0
    %v1432 = vand.u32 %v1199, 4294901760
    %v1433 = vsub.f32 %v1199, %v1432
    %1434 = vmatpush1.msra.mxu0 %v1433
    %1435 = vmatprep.subr.mxu0 0.0
    %v1436 = vand.u32 %v1198, 4294901760
    %v1437 = vsub.f32 %v1198, %v1436
    %1438 = vmatpush1.msra.mxu0 %v1437
    %1439 = vmatprep.subr.mxu0 0.0
    %v1440 = vand.u32 %v1197, 4294901760
    %v1441 = vsub.f32 %v1197, %v1440
    %1442 = vmatpush1.msra.mxu0 %v1441
    %1443 = vmatprep.subr.mxu0 0.0
    %v1444 = vand.u32 %v1196, 4294901760
    %v1445 = vsub.f32 %v1196, %v1444
    %1446 = vmatpush1.msra.mxu0 %v1445
    %1447 = vmatprep.subr.mxu0 0.0
    %v1448 = vand.u32 %v1195, 4294901760
    %v1449 = vsub.f32 %v1195, %v1448
    %1450 = vmatpush1.msra.mxu0 %v1449
    %1451 = vmatprep.subr.mxu0 0.0
    %v1452 = vand.u32 %v1194, 4294901760
    %v1453 = vsub.f32 %v1194, %v1452
    %1454 = vmatpush1.msra.mxu0 %v1453
    %1455 = vmatprep.subr.mxu0 0.0
    %1456 = vmatpush2.msra.mxu0 0.0
    %1457 = vmatprep.subr.mxu0 0.0
    %1458 = vmatpush2.msra.mxu0 0.0
    %1459 = vmatprep.subr.mxu0 0.0
    %1460 = vmatpush2.msra.mxu0 0.0
    %1461 = vmatprep.subr.mxu0 0.0
    %1462 = vmatpush2.msra.mxu0 0.0
    %1463 = vmatprep.subr.mxu0 0.0
    %1464 = vmatpush2.msra.mxu0 0.0
    %1465 = vmatprep.subr.mxu0 0.0
    %1466 = vmatpush2.msra.mxu0 0.0
    %1467 = vmatprep.subr.mxu0 0.0
    %1468 = vmatpush2.msra.mxu0 0.0
    %1469 = vmatprep.subr.mxu0 0.0
    %1470 = vmatpush2.msra.mxu0 0.0
    %1471 = vmatprep.subr.mxu0 0.0
    %1472 = vmatpush2.msra.mxu0 0.0
    %1473 = vmatprep.subr.mxu0 0.0
    %1474 = vmatpush2.msra.mxu0 0.0
    %1475 = vmatprep.subr.mxu0 0.0
    %1476 = vmatpush2.msra.mxu0 0.0
    %1477 = vmatprep.subr.mxu0 0.0
    %1478 = vmatpush2.msra.mxu0 0.0
    %1479 = vmatprep.subr.mxu0 0.0
    %1480 = vmatpush2.msra.mxu0 0.0
    %1481 = vmatprep.subr.mxu0 0.0
    %1482 = vmatpush2.msra.mxu0 0.0
    %1483 = vmatprep.subr.mxu0 0.0
    %1484 = vmatpush2.msra.mxu0 0.0
    %1485 = vmatprep.subr.mxu0 0.0
    %1486 = vmatpush2.msra.mxu0 0.0
    %1487 = vmatprep.mubr.f32.mxu0 0.0
    %v1488 = vand.u32 %v1211, 4294901760
    %v1489 = vsub.f32 %v1211, %v1488
    %1490 = vmatmul.mubr.f32.gmra.mxu0 %v1489
    %v1491 = vpop.f32.mrf.mxu0
    %v1492 = vadd.f32 %v1404, %v1491
    %v1493 = vpop.f32.mrf.mxu0
    %1494 = vdwg.mxu0
    %1495 = vmatprep.subr.mxu0 0.0
    %1496 = vmatpush1.msra.mxu0 0.0
    %1497 = vmatprep.subr.mxu0 0.0
    %1498 = vmatpush1.msra.mxu0 0.0
    %1499 = vmatprep.subr.mxu0 0.0
    %1500 = vmatpush1.msra.mxu0 0.0
    %1501 = vmatprep.subr.mxu0 0.0
    %1502 = vmatpush1.msra.mxu0 0.0
    %1503 = vmatprep.subr.mxu0 0.0
    %1504 = vmatpush1.msra.mxu0 0.0
    %1505 = vmatprep.subr.mxu0 0.0
    %1506 = vmatpush1.msra.mxu0 0.0
    %1507 = vmatprep.subr.mxu0 0.0
    %1508 = vmatpush1.msra.mxu0 0.0
    %1509 = vmatprep.subr.mxu0 0.0
    %1510 = vmatpush1.msra.mxu0 0.0
    %1511 = vmatprep.subr.mxu0 0.0
    %v1512 = vand.u32 %v1201, 4294901760
    %1513 = vmatpush1.msra.mxu0 %v1512
    %1514 = vmatprep.subr.mxu0 0.0
    %v1515 = vand.u32 %v1200, 4294901760
    %1516 = vmatpush1.msra.mxu0 %v1515
    %1517 = vmatprep.subr.mxu0 0.0
    %v1518 = vand.u32 %v1199, 4294901760
    %1519 = vmatpush1.msra.mxu0 %v1518
    %1520 = vmatprep.subr.mxu0 0.0
    %v1521 = vand.u32 %v1198, 4294901760
    %1522 = vmatpush1.msra.mxu0 %v1521
    %1523 = vmatprep.subr.mxu0 0.0
    %v1524 = vand.u32 %v1197, 4294901760
    %1525 = vmatpush1.msra.mxu0 %v1524
    %1526 = vmatprep.subr.mxu0 0.0
    %v1527 = vand.u32 %v1196, 4294901760
    %1528 = vmatpush1.msra.mxu0 %v1527
    %1529 = vmatprep.subr.mxu0 0.0
    %v1530 = vand.u32 %v1195, 4294901760
    %1531 = vmatpush1.msra.mxu0 %v1530
    %1532 = vmatprep.subr.mxu0 0.0
    %v1533 = vand.u32 %v1194, 4294901760
    %1534 = vmatpush1.msra.mxu0 %v1533
    %1535 = vmatprep.subr.mxu0 0.0
    %1536 = vmatpush2.msra.mxu0 0.0
    %1537 = vmatprep.subr.mxu0 0.0
    %1538 = vmatpush2.msra.mxu0 0.0
    %1539 = vmatprep.subr.mxu0 0.0
    %1540 = vmatpush2.msra.mxu0 0.0
    %1541 = vmatprep.subr.mxu0 0.0
    %1542 = vmatpush2.msra.mxu0 0.0
    %1543 = vmatprep.subr.mxu0 0.0
    %1544 = vmatpush2.msra.mxu0 0.0
    %1545 = vmatprep.subr.mxu0 0.0
    %1546 = vmatpush2.msra.mxu0 0.0
    %1547 = vmatprep.subr.mxu0 0.0
    %1548 = vmatpush2.msra.mxu0 0.0
    %1549 = vmatprep.subr.mxu0 0.0
    %1550 = vmatpush2.msra.mxu0 0.0
    %1551 = vmatprep.subr.mxu0 0.0
    %1552 = vmatpush2.msra.mxu0 0.0
    %1553 = vmatprep.subr.mxu0 0.0
    %1554 = vmatpush2.msra.mxu0 0.0
    %1555 = vmatprep.subr.mxu0 0.0
    %1556 = vmatpush2.msra.mxu0 0.0
    %1557 = vmatprep.subr.mxu0 0.0
    %1558 = vmatpush2.msra.mxu0 0.0
    %1559 = vmatprep.subr.mxu0 0.0
    %1560 = vmatpush2.msra.mxu0 0.0
    %1561 = vmatprep.subr.mxu0 0.0
    %1562 = vmatpush2.msra.mxu0 0.0
    %1563 = vmatprep.subr.mxu0 0.0
    %1564 = vmatpush2.msra.mxu0 0.0
    %1565 = vmatprep.subr.mxu0 0.0
    %1566 = vmatpush2.msra.mxu0 0.0
    %1567 = vmatprep.mubr.f32.mxu0 0.0
    %v1568 = vand.u32 %v1211, 4294901760
    %v1569 = vsub.f32 %v1211, %v1568
    %v1570 = vand.u32 %v1569, 4294901760
    %1571 = vmatmul.mubr.f32.gmra.mxu0 %v1570
    %v1572 = vpop.f32.mrf.mxu0
    %v1573 = vadd.f32 %v1492, %v1572
    %v1574 = vpop.f32.mrf.mxu0
    %1575 = vdwg.mxu0
    %1576 = vmatprep.subr.mxu0 0.0
    %1577 = vmatpush1.msra.mxu0 0.0
    %1578 = vmatprep.subr.mxu0 0.0
    %1579 = vmatpush1.msra.mxu0 0.0
    %1580 = vmatprep.subr.mxu0 0.0
    %1581 = vmatpush1.msra.mxu0 0.0
    %1582 = vmatprep.subr.mxu0 0.0
    %1583 = vmatpush1.msra.mxu0 0.0
    %1584 = vmatprep.subr.mxu0 0.0
    %1585 = vmatpush1.msra.mxu0 0.0
    %1586 = vmatprep.subr.mxu0 0.0
    %1587 = vmatpush1.msra.mxu0 0.0
    %1588 = vmatprep.subr.mxu0 0.0
    %1589 = vmatpush1.msra.mxu0 0.0
    %1590 = vmatprep.subr.mxu0 0.0
    %1591 = vmatpush1.msra.mxu0 0.0
    %1592 = vmatprep.subr.mxu0 0.0
    %v1593 = vand.u32 %v1201, 4294901760
    %v1594 = vsub.f32 %v1201, %v1593
    %v1595 = vand.u32 %v1594, 4294901760
    %1596 = vmatpush1.msra.mxu0 %v1595
    %1597 = vmatprep.subr.mxu0 0.0
    %v1598 = vand.u32 %v1200, 4294901760
    %v1599 = vsub.f32 %v1200, %v1598
    %v1600 = vand.u32 %v1599, 4294901760
    %1601 = vmatpush1.msra.mxu0 %v1600
    %1602 = vmatprep.subr.mxu0 0.0
    %v1603 = vand.u32 %v1199, 4294901760
    %v1604 = vsub.f32 %v1199, %v1603
    %v1605 = vand.u32 %v1604, 4294901760
    %1606 = vmatpush1.msra.mxu0 %v1605
    %1607 = vmatprep.subr.mxu0 0.0
    %v1608 = vand.u32 %v1198, 4294901760
    %v1609 = vsub.f32 %v1198, %v1608
    %v1610 = vand.u32 %v1609, 4294901760
    %1611 = vmatpush1.msra.mxu0 %v1610
    %1612 = vmatprep.subr.mxu0 0.0
    %v1613 = vand.u32 %v1197, 4294901760
    %v1614 = vsub.f32 %v1197, %v1613
    %v1615 = vand.u32 %v1614, 4294901760
    %1616 = vmatpush1.msra.mxu0 %v1615
    %1617 = vmatprep.subr.mxu0 0.0
    %v1618 = vand.u32 %v1196, 4294901760
    %v1619 = vsub.f32 %v1196, %v1618
    %v1620 = vand.u32 %v1619, 4294901760
    %1621 = vmatpush1.msra.mxu0 %v1620
    %1622 = vmatprep.subr.mxu0 0.0
    %v1623 = vand.u32 %v1195, 4294901760
    %v1624 = vsub.f32 %v1195, %v1623
    %v1625 = vand.u32 %v1624, 4294901760
    %1626 = vmatpush1.msra.mxu0 %v1625
    %1627 = vmatprep.subr.mxu0 0.0
    %v1628 = vand.u32 %v1194, 4294901760
    %v1629 = vsub.f32 %v1194, %v1628
    %v1630 = vand.u32 %v1629, 4294901760
    %1631 = vmatpush1.msra.mxu0 %v1630
    %1632 = vmatprep.subr.mxu0 0.0
    %1633 = vmatpush2.msra.mxu0 0.0
    %1634 = vmatprep.subr.mxu0 0.0
    %1635 = vmatpush2.msra.mxu0 0.0
    %1636 = vmatprep.subr.mxu0 0.0
    %1637 = vmatpush2.msra.mxu0 0.0
    %1638 = vmatprep.subr.mxu0 0.0
    %1639 = vmatpush2.msra.mxu0 0.0
    %1640 = vmatprep.subr.mxu0 0.0
    %1641 = vmatpush2.msra.mxu0 0.0
    %1642 = vmatprep.subr.mxu0 0.0
    %1643 = vmatpush2.msra.mxu0 0.0
    %1644 = vmatprep.subr.mxu0 0.0
    %1645 = vmatpush2.msra.mxu0 0.0
    %1646 = vmatprep.subr.mxu0 0.0
    %1647 = vmatpush2.msra.mxu0 0.0
    %1648 = vmatprep.subr.mxu0 0.0
    %1649 = vmatpush2.msra.mxu0 0.0
    %1650 = vmatprep.subr.mxu0 0.0
    %1651 = vmatpush2.msra.mxu0 0.0
    %1652 = vmatprep.subr.mxu0 0.0
    %1653 = vmatpush2.msra.mxu0 0.0
    %1654 = vmatprep.subr.mxu0 0.0
    %1655 = vmatpush2.msra.mxu0 0.0
    %1656 = vmatprep.subr.mxu0 0.0
    %1657 = vmatpush2.msra.mxu0 0.0
    %1658 = vmatprep.subr.mxu0 0.0
    %1659 = vmatpush2.msra.mxu0 0.0
    %1660 = vmatprep.subr.mxu0 0.0
    %1661 = vmatpush2.msra.mxu0 0.0
    %1662 = vmatprep.subr.mxu0 0.0
    %1663 = vmatpush2.msra.mxu0 0.0
    %1664 = vmatprep.mubr.f32.mxu0 0.0
    %v1665 = vand.u32 %v1211, 4294901760
    %1666 = vmatmul.mubr.f32.gmra.mxu0 %v1665
    %v1667 = vpop.f32.mrf.mxu0
    %v1668 = vadd.f32 %v1573, %v1667
    %v1669 = vpop.f32.mrf.mxu0
    %1670 = vdwg.mxu0
    %1671 = vmatprep.subr.mxu0 0.0
    %1672 = vmatpush1.msra.mxu0 0.0
    %1673 = vmatprep.subr.mxu0 0.0
    %1674 = vmatpush1.msra.mxu0 0.0
    %1675 = vmatprep.subr.mxu0 0.0
    %1676 = vmatpush1.msra.mxu0 0.0
    %1677 = vmatprep.subr.mxu0 0.0
    %1678 = vmatpush1.msra.mxu0 0.0
    %1679 = vmatprep.subr.mxu0 0.0
    %1680 = vmatpush1.msra.mxu0 0.0
    %1681 = vmatprep.subr.mxu0 0.0
    %1682 = vmatpush1.msra.mxu0 0.0
    %1683 = vmatprep.subr.mxu0 0.0
    %1684 = vmatpush1.msra.mxu0 0.0
    %1685 = vmatprep.subr.mxu0 0.0
    %1686 = vmatpush1.msra.mxu0 0.0
    %1687 = vmatprep.subr.mxu0 0.0
    %v1688 = vand.u32 %v1201, 4294901760
    %1689 = vmatpush1.msra.mxu0 %v1688
    %1690 = vmatprep.subr.mxu0 0.0
    %v1691 = vand.u32 %v1200, 4294901760
    %1692 = vmatpush1.msra.mxu0 %v1691
    %1693 = vmatprep.subr.mxu0 0.0
    %v1694 = vand.u32 %v1199, 4294901760
    %1695 = vmatpush1.msra.mxu0 %v1694
    %1696 = vmatprep.subr.mxu0 0.0
    %v1697 = vand.u32 %v1198, 4294901760
    %1698 = vmatpush1.msra.mxu0 %v1697
    %1699 = vmatprep.subr.mxu0 0.0
    %v1700 = vand.u32 %v1197, 4294901760
    %1701 = vmatpush1.msra.mxu0 %v1700
    %1702 = vmatprep.subr.mxu0 0.0
    %v1703 = vand.u32 %v1196, 4294901760
    %1704 = vmatpush1.msra.mxu0 %v1703
    %1705 = vmatprep.subr.mxu0 0.0
    %v1706 = vand.u32 %v1195, 4294901760
    %1707 = vmatpush1.msra.mxu0 %v1706
    %1708 = vmatprep.subr.mxu0 0.0
    %v1709 = vand.u32 %v1194, 4294901760
    %1710 = vmatpush1.msra.mxu0 %v1709
    %1711 = vmatprep.subr.mxu0 0.0
    %1712 = vmatpush2.msra.mxu0 0.0
    %1713 = vmatprep.subr.mxu0 0.0
    %1714 = vmatpush2.msra.mxu0 0.0
    %1715 = vmatprep.subr.mxu0 0.0
    %1716 = vmatpush2.msra.mxu0 0.0
    %1717 = vmatprep.subr.mxu0 0.0
    %1718 = vmatpush2.msra.mxu0 0.0
    %1719 = vmatprep.subr.mxu0 0.0
    %1720 = vmatpush2.msra.mxu0 0.0
    %1721 = vmatprep.subr.mxu0 0.0
    %1722 = vmatpush2.msra.mxu0 0.0
    %1723 = vmatprep.subr.mxu0 0.0
    %1724 = vmatpush2.msra.mxu0 0.0
    %1725 = vmatprep.subr.mxu0 0.0
    %1726 = vmatpush2.msra.mxu0 0.0
    %1727 = vmatprep.subr.mxu0 0.0
    %1728 = vmatpush2.msra.mxu0 0.0
    %1729 = vmatprep.subr.mxu0 0.0
    %1730 = vmatpush2.msra.mxu0 0.0
    %1731 = vmatprep.subr.mxu0 0.0
    %1732 = vmatpush2.msra.mxu0 0.0
    %1733 = vmatprep.subr.mxu0 0.0
    %1734 = vmatpush2.msra.mxu0 0.0
    %1735 = vmatprep.subr.mxu0 0.0
    %1736 = vmatpush2.msra.mxu0 0.0
    %1737 = vmatprep.subr.mxu0 0.0
    %1738 = vmatpush2.msra.mxu0 0.0
    %1739 = vmatprep.subr.mxu0 0.0
    %1740 = vmatpush2.msra.mxu0 0.0
    %1741 = vmatprep.subr.mxu0 0.0
    %1742 = vmatpush2.msra.mxu0 0.0
    %1743 = vmatprep.mubr.f32.mxu0 0.0
    %v1744 = vand.u32 %v1211, 4294901760
    %1745 = vmatmul.mubr.f32.gmra.mxu0 %v1744
    %v1746 = vpop.f32.mrf.mxu0
    %v1747 = vadd.f32 %v1668, %v1746
    %v1748 = vpop.f32.mrf.mxu0
    %1749 = vdwg.mxu0
    %vm1750 = vcmask 130048
    %1751 = vst.msk [vmem:[#allocation2] sm:$0xff] %vm1750, %v1747
    // Predicated region
    $region30: #{tpu_custom_call.1} parent=1 // pred_check
      _
    $region31: #{tpu_custom_call.1} parent=1 // pred_check_branch
      %1753 = sbr.rel (0) target = $region33
    $region32: #{tpu_custom_call.1} parent=1 // pred_region
      %s1755 = ssub.s32 128, 128
      %1756 = vsyncadd [#allocation3], %s1755
      %s1758 = sshll.u32 [#allocation2], 4
      %s1759 = int_to_ptr.vmem [resolvable:$true] %s1758
      %1761 = dma.vmem_to_hbm [thread:$0]  %s1759, 128, %s7, [#allocation3]
    $region33: #{tpu_custom_call.1} parent=1 // pred_fallthru
      _
    // Predicated region
    $region34: #{tpu_custom_call.1} parent=1 // pred_check
      _
    $region35: #{tpu_custom_call.1} parent=1 // pred_check_branch
      %1763 = sbr.rel (0) target = $region37
    $region36: #{tpu_custom_call.1} parent=1 // pred_region
      %1764 = dma.done [#allocation3], 128
    $region37: #{tpu_custom_call.1} parent=1 // pred_fallthru
      _
    %1765 = vsyncpa [#allocation3], 1

</llo_original>
